<compile_context>
chip_gen: v7x
topology: tpu7x:2x2x1
jax: 0.10.0
libtpu: 0.0.40
codegen_flags: <defaults>
</compile_context>

<pallas_src>
import numpy as np
import jax
import jax.numpy as jnp
from jax import lax
from jax.experimental import pallas as pl
from jax.experimental.pallas import tpu as pltpu

_BN_EPS = 1e-5
_LANES = 128

# rows of the packed per-channel-vector table (biases, BN gammas / betas)
(_BG, _GG, _BTG, _BX, _GX, _BTX, _BPSI, _GPSI, _BTPSI,
 _B1, _G1, _BT1, _B2, _G2, _BT2) = range(15)
_VEC_ROWS = 16


# --------------------------- constant builders (numpy) -----------------------

def _bilinear_matrix(size_in, size_out):
    """(size_out, size_in) 1-D bilinear interpolation matrix, align_corners=True."""
    m = np.zeros((size_out, size_in), np.float32)
    if size_in == 1:
        m[:, 0] = 1.0
        return m
    if size_out == 1:
        m[0, 0] = 1.0
        return m
    src = np.arange(size_out) * (size_in - 1) / (size_out - 1)
    i0 = np.clip(np.floor(src).astype(np.int64), 0, size_in - 1)
    i1 = np.clip(i0 + 1, 0, size_in - 1)
    frac = (src - i0).astype(np.float32)
    m[np.arange(size_out), i0] += 1.0 - frac
    m[np.arange(size_out), i1] += frac
    return m


def _axis_interp_matrix(size_in, size_target):
    """scale=2 upsample then (if needed) resize to size_target — matches
    nn.Upsample(scale_factor=2) followed by F.interpolate(size=...)."""
    m = _bilinear_matrix(size_in, 2 * size_in)
    if 2 * size_in != size_target:
        m = _bilinear_matrix(2 * size_in, size_target) @ m
    return m.astype(np.float32)


def _toeplitz(w_hwio, w):
    """(3,3,Ci,Co) HWIO -> (3, w*Ci, w*Co): per-dy block-Toeplitz weights with
    the W-direction taps and 'SAME' zero padding folded in."""
    ci, co = w_hwio.shape[2], w_hwio.shape[3]
    out = np.zeros((3, w * ci, w * co), np.float32)
    for dy in range(3):
        for dx in range(3):
            e = np.eye(w, w, 1 - dx, dtype=np.float32)
            out[dy] += np.kron(e, w_hwio[dy, dx])
    return out


# --------------------------- one-time parameter expansion ---------------------

def prepare_up_block_params(params, n, hs, ws, h, w):
    """Hoisted out of the forward path (perf-review item 5): expand the module
    parameters once, on the host, into the kernel's lane-dense constants."""
    p = {k: np.asarray(v, np.float32) for k, v in params.items()}
    cg = p["wg"].shape[0]          # gating (decoder) channels
    cs = p["wx"].shape[0]          # skip channels
    fi = p["wg"].shape[1]          # F_int
    co = p["w1"].shape[-1]         # output channels
    c_lane = _LANES // w
    assert (w * cg == _LANES and w * cs == _LANES and w * co == _LANES
            and fi <= c_lane and (w & (w - 1)) == 0), \
        "this script keeps every activation at exactly 128 lanes"
    # TODO(synk): general channel counts / widths need lane padding or multi-tile lanes.

    f32 = np.float32
    eye_w = np.eye(w, dtype=f32)

    # separable bilinear upsample matrices (kept f32 — tiny and feed everything)
    mh = _axis_interp_matrix(hs, h)                        # (h, hs)
    mw = _axis_interp_matrix(ws, w)                        # (w, ws)
    mh_big = np.kron(np.eye(n, dtype=f32), mh)             # (n*h, n*hs)
    mw_exp = np.kron(np.ascontiguousarray(mw.T), np.eye(cg, dtype=f32))  # (ws*cg, w*cg)

    # attention-gate 1x1 convs as one stacked kron-expanded weight; F_int is
    # lane-padded from fi to c_lane so the gate stays in the 128-lane layout.
    wg_pad = np.zeros((cg, c_lane), f32); wg_pad[:, :fi] = p["wg"]
    wx_pad = np.zeros((cs, c_lane), f32); wx_pad[:, :fi] = p["wx"]
    wpsi_blk = np.zeros((c_lane, cs), f32)
    wpsi_blk[:fi, :] = p["wpsi"] @ np.ones((1, cs), f32)   # psi replicated over Cs lanes
    w_gate = np.stack([np.kron(eye_w, wg_pad),
                       np.kron(eye_w, wx_pad),
                       np.kron(eye_w, wpsi_blk)])          # (3, 128, 128)

    # conv block: per-dy block-Toeplitz weights.  conv1's x_up / gated-skip
    # halves are stacked along K -> one K=256 matmul set (perf-review item 1).
    tt1 = np.concatenate([_toeplitz(p["w1"][:, :, :cg, :], w),
                          _toeplitz(p["w1"][:, :, cg:, :], w)], axis=1)   # (3, 256, 128)
    tt2 = _toeplitz(p["w2"], w)                                           # (3, 128, 128)

    # every per-channel vector packed into one (16, 128) lane-dense table
    def lane_gate(v, fill):
        g = np.full((c_lane,), fill, f32); g[:fi] = v.reshape(-1)
        return np.tile(g, w)

    def lane_chan(v):
        return np.tile(v.reshape(-1).astype(f32), w)

    def lane_scalar(v):
        return np.full((_LANES,), float(v.reshape(-1)[0]), f32)

    vec = np.zeros((_VEC_ROWS, _LANES), f32)
    vec[_BG] = lane_gate(p["bg"], 0.0)
    vec[_GG] = lane_gate(p["bn_g_gamma"], 1.0)
    vec[_BTG] = lane_gate(p["bn_g_beta"], 0.0)
    vec[_BX] = lane_gate(p["bx"], 0.0)
    vec[_GX] = lane_gate(p["bn_x_gamma"], 1.0)
    vec[_BTX] = lane_gate(p["bn_x_beta"], 0.0)
    vec[_BPSI] = lane_scalar(p["bpsi"])
    vec[_GPSI] = lane_scalar(p["bn_psi_gamma"])
    vec[_BTPSI] = lane_scalar(p["bn_psi_beta"])
    vec[_B1] = lane_chan(p["b1"])
    vec[_G1] = lane_chan(p["bn1_gamma"])
    vec[_BT1] = lane_chan(p["bn1_beta"])
    vec[_B2] = lane_chan(p["b2"])
    vec[_G2] = lane_chan(p["bn2_gamma"])
    vec[_BT2] = lane_chan(p["bn2_beta"])

    return dict(
        mh_big=jnp.asarray(mh_big),
        mw_exp=jnp.asarray(mw_exp),
        w_gate=jnp.asarray(w_gate),
        tt1=jnp.asarray(tt1, dtype=jnp.bfloat16),   # bf16 MXU operands (conv stages)
        tt2=jnp.asarray(tt2, dtype=jnp.bfloat16),
        vec=jnp.asarray(vec),
    )


# --------------------------- parameters --------------------------------------

def init_params(key, in_channels, skip_channels, out_channels):
    f_int = skip_channels // 2
    ks = jax.random.split(key, 20)

    def w(k, shape, scale=0.1):
        return scale * jax.random.normal(k, shape, jnp.float32)

    return dict(
        # AttentionGate (1x1 convs stored as (Cin, Cout) matmul weights)
        wg=w(ks[0], (in_channels, f_int)),      bg=w(ks[1], (1, f_int)),
        wx=w(ks[2], (skip_channels, f_int)),    bx=w(ks[3], (1, f_int)),
        wpsi=w(ks[4], (f_int, 1)),              bpsi=w(ks[5], (1, 1)),
        bn_g_gamma=1.0 + w(ks[6], (1, f_int)),  bn_g_beta=w(ks[7], (1, f_int)),
        bn_x_gamma=1.0 + w(ks[8], (1, f_int)),  bn_x_beta=w(ks[9], (1, f_int)),
        bn_psi_gamma=1.0 + w(ks[10], (1, 1)),   bn_psi_beta=w(ks[11], (1, 1)),
        # conv block (3x3 weights stored HWIO)
        w1=w(ks[12], (3, 3, in_channels + skip_channels, out_channels)),
        b1=w(ks[13], (1, out_channels)),
        bn1_gamma=1.0 + w(ks[14], (1, out_channels)),
        bn1_beta=w(ks[15], (1, out_channels)),
        w2=w(ks[16], (3, 3, out_channels, out_channels)),
        b2=w(ks[17], (1, out_channels)),
        bn2_gamma=1.0 + w(ks[18], (1, out_channels)),
        bn2_beta=w(ks[19], (1, out_channels)),
    )


# --------------------------- forward (fused Pallas kernel) --------------------

def up_block_forward(x_nchw, skip_nchw, prepared):
    x = jnp.transpose(x_nchw, (0, 2, 3, 1)).astype(jnp.float32)      # NHWC
    skip = jnp.transpose(skip_nchw, (0, 2, 3, 1)).astype(jnp.float32)
    n, hs, ws, cg = x.shape
    _, h, w, cs = skip.shape
    r = n * h                                   # sublane rows of every activation
    c_lane = _LANES // w                        # channels per lane group
    count = float(r * w)                        # samples per channel for BN
    f32 = jnp.float32
    bf16 = jnp.bfloat16

    x_rows = x.reshape(n * hs, ws * cg)         # (N*Hs, Ws*Cg) lane-dense
    skip_rows = skip.reshape(r, w * cs)         # (N*H,  W*Cs) = (R, 128)

    def kernel(x_ref, skip_ref, mh_ref, mw_ref, wgate_ref, tt1_ref, tt2_ref,
               vec_ref, o_ref):

        def mm(a, b):                                    # f32 MXU matmul
            return jnp.dot(a, b, preferred_element_type=f32)

        def mmb(a, b):                                   # bf16 operands, f32 acc
            return jnp.dot(a.astype(bf16), b, preferred_element_type=f32)

        vec = vec_ref[...]

        def row(i):                                      # (1, 128) static slice
            return vec[i:i + 1, :]

        # per-channel mean over (rows, W-groups), broadcast back to every lane:
        # lane roll-tree (XLU) over the cyclic group of stride c_lane, then an
        # XLU sublane reduce — no MXU involvement (perf-review item 6).
        def group_mean(v):
            t = v
            sh = c_lane
            while sh < _LANES:
                t = t + pltpu.roll(t, sh, 1)
                sh *= 2
            return jnp.sum(t, axis=0, keepdims=True) * (1.0 / count)

        def bn(v, gamma, beta):   # training-mode BN, stable two-pass variance
            mu = group_mean(v)
            xc = v - mu
            var = group_mean(xc * xc)
            return xc * (gamma * lax.rsqrt(var + _BN_EPS)) + beta

        # row masks for the 3x3 H-halo: zero rows whose rolled source crosses an
        # image (or batch-wrap) boundary (perf-review item 2).
        rid = lax.broadcasted_iota(jnp.int32, (r, 1), 0)
        not_top = (rid % h != 0).astype(f32)             # source row y-1 invalid at y == 0
        not_bot = (rid % h != h - 1).astype(f32)         # source row y+1 invalid at y == h-1

        def conv3x3(v, tt_ref):
            # dy = 0/2 taps via sublane roll (XLU, jnp.roll convention:
            # out[i] = in[(i - shift) % R]) + boundary mask; dx taps and the
            # W zero-padding live in the block-Toeplitz weights -> 3 matmuls.
            v_up = pltpu.roll(v, 1, 0) * not_top         # row i <- row i-1
            v_dn = pltpu.roll(v, r - 1, 0) * not_bot     # row i <- row i+1
            return (mmb(v_up, tt_ref[0]) + mmb(v, tt_ref[1])
                    + mmb(v_dn, tt_ref[2]))

        # ---- 1) separable bilinear upsample (two small f32 matmuls) ----------
        xu = mm(mm(mh_ref[...], x_ref[...]), mw_ref[...])          # (R, 128)

        # ---- 2) attention gate, all at 128 lanes (F_int lane-padded) ---------
        skip_v = skip_ref[...]
        g1 = bn(mm(xu, wgate_ref[0]) + row(_BG), row(_GG), row(_BTG))
        x1 = bn(mm(skip_v, wgate_ref[1]) + row(_BX), row(_GX), row(_BTX))
        p = jnp.maximum(g1 + x1, 0.0)
        psi = bn(mm(p, wgate_ref[2]) + row(_BPSI), row(_GPSI), row(_BTPSI))
        psi = 1.0 / (1.0 + jnp.exp(-psi))                # sigmoid (exp on EUP)
        skip_att = skip_v * psi                          # per-pixel gating

        # ---- 3+4) concat-free 3x3 conv + BN + ReLU, twice ---------------------
        cat = jnp.concatenate([xu, skip_att], axis=1)    # (R, 256): K=256 conv1
        y1 = jnp.maximum(
            bn(conv3x3(cat, tt1_ref) + row(_B1), row(_G1), row(_BT1)), 0.0)
        y2 = jnp.maximum(
            bn(conv3x3(y1, tt2_ref) + row(_B2), row(_G2), row(_BT2)), 0.0)
        o_ref[...] = y2                                  # (R, 128): unmasked stores

    vmem = pl.BlockSpec(memory_space=pltpu.MemorySpace.VMEM)
    args = (x_rows, skip_rows, prepared["mh_big"], prepared["mw_exp"],
            prepared["w_gate"], prepared["tt1"], prepared["tt2"], prepared["vec"])
    y_rows = pl.pallas_call(
        kernel,
        out_shape=jax.ShapeDtypeStruct((r, _LANES), jnp.float32),
        in_specs=[vmem] * len(args),
        out_specs=vmem,
        compiler_params=pltpu.CompilerParams(
            vmem_limit_bytes=16 * 1024 * 1024),          # right-sized (item 7)
    )(*args)

    co = _LANES // w
    y = y_rows.reshape(n, h, w, co)
    return jnp.transpose(y, (0, 3, 1, 2))                # NCHW


# --------------------------- plain-JAX reference ------------------------------

def _bn_train(x, gamma, beta):
    mean = jnp.mean(x, axis=0, keepdims=True)
    var = jnp.mean((x - mean) ** 2, axis=0, keepdims=True)
    return (x - mean) * lax.rsqrt(var + _BN_EPS) * gamma + beta


def up_block_reference(x_nchw, skip_nchw, params):
    x = jnp.transpose(x_nchw, (0, 2, 3, 1)).astype(jnp.float32)
    skip = jnp.transpose(skip_nchw, (0, 2, 3, 1)).astype(jnp.float32)
    n, hs, ws, cg = x.shape
    _, h, w, cs = skip.shape

    mh = jnp.asarray(_axis_interp_matrix(hs, h))
    mw = jnp.asarray(_axis_interp_matrix(ws, w))
    x_up = jnp.einsum('ha,wb,nabc->nhwc', mh, mw, x)

    skip_flat = skip.reshape(-1, cs)
    g_flat = x_up.reshape(-1, cg)
    g1 = _bn_train(g_flat @ params["wg"] + params["bg"],
                   params["bn_g_gamma"], params["bn_g_beta"])
    x1 = _bn_train(skip_flat @ params["wx"] + params["bx"],
                   params["bn_x_gamma"], params["bn_x_beta"])
    p = jnp.maximum(g1 + x1, 0.0)
    psi = _bn_train(p @ params["wpsi"] + params["bpsi"],
                    params["bn_psi_gamma"], params["bn_psi_beta"])
    psi = jax.nn.sigmoid(psi)
    skip_att = (skip_flat * psi).reshape(n, h, w, cs)

    cat = jnp.concatenate([x_up, skip_att], axis=-1)

    def cbr(inp, wk, bk, gk, bek):
        out = lax.conv_general_dilated(inp, wk, (1, 1), 'SAME',
                                       dimension_numbers=('NHWC', 'HWIO', 'NHWC'))
        flat = out.reshape(-1, out.shape[-1]) + bk
        flat = jnp.maximum(_bn_train(flat, gk, bek), 0.0)
        return flat.reshape(out.shape)

    y = cbr(cat, params["w1"], params["b1"], params["bn1_gamma"], params["bn1_beta"])
    y = cbr(y, params["w2"], params["b2"], params["bn2_gamma"], params["bn2_beta"])
    return jnp.transpose(y, (0, 3, 1, 2))


# --------------------------- main ---------------------------------------------

if __name__ == "__main__":
    key = jax.random.PRNGKey(0)
    k_x, k_skip, k_p = jax.random.split(key, 3)

    in_channels, skip_channels, out_channels = 8, 8, 8
    N, Hs, Ws = 2, 8, 8                              # decoder feature is 8x8
    H, W = 2 * Hs, 2 * Ws                            # skip feature is 16x16

    x = jax.random.normal(k_x, (N, in_channels, Hs, Ws), jnp.float32)        # NCHW
    skip = jax.random.normal(k_skip, (N, skip_channels, H, W), jnp.float32)  # NCHW
    params = init_params(k_p, in_channels, skip_channels, out_channels)

    # one-time parameter expansion, hoisted out of the forward path (item 5)
    prepared = prepare_up_block_params(params, N, Hs, Ws, H, W)

    fwd = jax.jit(up_block_forward)
    out = jax.block_until_ready(fwd(x, skip, prepared))
    ref = jax.block_until_ready(up_block_reference(x, skip, params))

    assert out.shape == (N, out_channels, H, W), out.shape
    assert bool(jnp.all(jnp.isfinite(out)))
    max_err = float(jnp.max(jnp.abs(out - ref)))
    # bf16 MXU operands in the two conv stages (~2^-9 relative per operand,
    # two stages deep) keep the deviation from the f32 reference well inside 5e-2;
    # the upsample / attention-gate path stays f32 so the gate itself is exact.
    assert max_err < 5e-2, f"mismatch vs reference: {max_err}"
    print("KERNEL_OK")
</pallas_src>

<mosaic_0001>
module attributes {stable_mosaic.version = 11 : i64} {
  func.func @kernel(%arg0: memref<16x64xf32, #tpu.memory_space<vmem>>, %arg1: memref<32x128xf32, #tpu.memory_space<vmem>>, %arg2: memref<32x16xf32, #tpu.memory_space<vmem>>, %arg3: memref<64x128xf32, #tpu.memory_space<vmem>>, %arg4: memref<3x128x128xf32, #tpu.memory_space<vmem>>, %arg5: memref<3x256x128xbf16, #tpu.memory_space<vmem>>, %arg6: memref<3x128x128xbf16, #tpu.memory_space<vmem>>, %arg7: memref<16x128xf32, #tpu.memory_space<vmem>>, %arg8: memref<32x128xf32, #tpu.memory_space<vmem>>) attributes {dimension_semantics = [], scalar_prefetch = 0 : i64, scratch_operands = 0 : i64, tpu.core_type = #tpu.core_type<tc>} {
    %c0 = arith.constant 0 : index
    %c0_0 = arith.constant 0 : index
    %0 = vector.load %arg7[%c0, %c0_0] : memref<16x128xf32, #tpu.memory_space<vmem>>, vector<16x128xf32>
    %1 = tpu.iota {dimensions = array<i32: 0>} : vector<32x1xi32>
    %c16_i32 = arith.constant 16 : i32
    %c0_i32 = arith.constant 0 : i32
    %2 = arith.cmpi eq, %c16_i32, %c0_i32 : i32
    %c1_i32 = arith.constant 1 : i32
    %3 = arith.select %2, %c1_i32, %c16_i32 : i32
    %4 = vector.broadcast %3 : i32 to vector<32x1xi32>
    %5 = arith.remsi %1, %4 : vector<32x1xi32>
    %c0_i32_1 = arith.constant 0 : i32
    %6 = vector.broadcast %c0_i32_1 : i32 to vector<32x1xi32>
    %7 = arith.cmpi ne, %5, %6 : vector<32x1xi32>
    %c0_i32_2 = arith.constant 0 : i32
    %8 = vector.broadcast %c0_i32_2 : i32 to vector<32x1xi32>
    %9 = arith.cmpi slt, %5, %8 : vector<32x1xi32>
    %c0_i32_3 = arith.constant 0 : i32
    %10 = arith.cmpi slt, %3, %c0_i32_3 : i32
    %11 = vector.broadcast %10 : i1 to vector<32x1xi1>
    %12 = vector.broadcast %11 : vector<32x1xi1> to vector<32x1xi1>
    %13 = arith.xori %9, %12 : vector<32x1xi1>
    %14 = arith.andi %13, %7 : vector<32x1xi1>
    %15 = vector.broadcast %3 : i32 to vector<32x1xi32>
    %16 = arith.addi %5, %15 : vector<32x1xi32>
    %17 = arith.select %14, %16, %5 : vector<32x1xi1>, vector<32x1xi32>
    %c0_i32_4 = arith.constant 0 : i32
    %18 = vector.broadcast %c0_i32_4 : i32 to vector<32x1xi32>
    %19 = arith.cmpi ne, %17, %18 : vector<32x1xi32>
    %20 = arith.extui %19 : vector<32x1xi1> to vector<32x1xi32>
    %21 = arith.sitofp %20 : vector<32x1xi32> to vector<32x1xf32>
    %c16_i32_5 = arith.constant 16 : i32
    %c0_i32_6 = arith.constant 0 : i32
    %22 = arith.cmpi eq, %c16_i32_5, %c0_i32_6 : i32
    %c1_i32_7 = arith.constant 1 : i32
    %23 = arith.select %22, %c1_i32_7, %c16_i32_5 : i32
    %24 = vector.broadcast %23 : i32 to vector<32x1xi32>
    %25 = arith.remsi %1, %24 : vector<32x1xi32>
    %c0_i32_8 = arith.constant 0 : i32
    %26 = vector.broadcast %c0_i32_8 : i32 to vector<32x1xi32>
    %27 = arith.cmpi ne, %25, %26 : vector<32x1xi32>
    %c0_i32_9 = arith.constant 0 : i32
    %28 = vector.broadcast %c0_i32_9 : i32 to vector<32x1xi32>
    %29 = arith.cmpi slt, %25, %28 : vector<32x1xi32>
    %c0_i32_10 = arith.constant 0 : i32
    %30 = arith.cmpi slt, %23, %c0_i32_10 : i32
    %31 = vector.broadcast %30 : i1 to vector<32x1xi1>
    %32 = vector.broadcast %31 : vector<32x1xi1> to vector<32x1xi1>
    %33 = arith.xori %29, %32 : vector<32x1xi1>
    %34 = arith.andi %33, %27 : vector<32x1xi1>
    %35 = vector.broadcast %23 : i32 to vector<32x1xi32>
    %36 = arith.addi %25, %35 : vector<32x1xi32>
    %37 = arith.select %34, %36, %25 : vector<32x1xi1>, vector<32x1xi32>
    %c15_i32 = arith.constant 15 : i32
    %38 = vector.broadcast %c15_i32 : i32 to vector<32x1xi32>
    %39 = arith.cmpi ne, %37, %38 : vector<32x1xi32>
    %40 = arith.extui %39 : vector<32x1xi1> to vector<32x1xi32>
    %41 = arith.sitofp %40 : vector<32x1xi32> to vector<32x1xf32>
    %c0_11 = arith.constant 0 : index
    %c0_12 = arith.constant 0 : index
    %42 = vector.load %arg2[%c0_11, %c0_12] : memref<32x16xf32, #tpu.memory_space<vmem>>, vector<32x16xf32>
    %c0_13 = arith.constant 0 : index
    %c0_14 = arith.constant 0 : index
    %43 = vector.load %arg0[%c0_13, %c0_14] : memref<16x64xf32, #tpu.memory_space<vmem>>, vector<16x64xf32>
    %cst = arith.constant dense<0.000000e+00> : vector<32x64xf32>
    %44 = tpu.matmul %42, %43, %cst {dimension_numbers = #tpu.dot_dimension_numbers<[1], [0], [0], [1], [0, 0, 1, 1], [], []>} : vector<32x16xf32>, vector<16x64xf32>, vector<32x64xf32> -> vector<32x64xf32>
    %c0_15 = arith.constant 0 : index
    %c0_16 = arith.constant 0 : index
    %45 = vector.load %arg3[%c0_15, %c0_16] : memref<64x128xf32, #tpu.memory_space<vmem>>, vector<64x128xf32>
    %cst_17 = arith.constant dense<0.000000e+00> : vector<32x128xf32>
    %46 = tpu.matmul %44, %45, %cst_17 {dimension_numbers = #tpu.dot_dimension_numbers<[1], [0], [0], [1], [0, 0, 1, 1], [], []>} : vector<32x64xf32>, vector<64x128xf32>, vector<32x128xf32> -> vector<32x128xf32>
    %c0_18 = arith.constant 0 : index
    %c0_19 = arith.constant 0 : index
    %47 = vector.load %arg1[%c0_18, %c0_19] : memref<32x128xf32, #tpu.memory_space<vmem>>, vector<32x128xf32>
    %c0_20 = arith.constant 0 : index
    %c0_21 = arith.constant 0 : index
    %c0_22 = arith.constant 0 : index
    %48 = vector.load %arg4[%c0_20, %c0_21, %c0_22] : memref<3x128x128xf32, #tpu.memory_space<vmem>>, vector<1x128x128xf32>
    %49 = vector.shape_cast %48 : vector<1x128x128xf32> to vector<128x128xf32>
    %cst_23 = arith.constant dense<0.000000e+00> : vector<32x128xf32>
    %50 = tpu.matmul %46, %49, %cst_23 {dimension_numbers = #tpu.dot_dimension_numbers<[1], [0], [0], [1], [0, 0, 1, 1], [], []>} : vector<32x128xf32>, vector<128x128xf32>, vector<32x128xf32> -> vector<32x128xf32>
    %51 = vector.extract_strided_slice %0 {offsets = [0, 0], sizes = [1, 128], strides = [1, 1]} : vector<16x128xf32> to vector<1x128xf32>
    %52 = vector.broadcast %51 : vector<1x128xf32> to vector<32x128xf32>
    %53 = arith.addf %50, %52 : vector<32x128xf32>
    %54 = vector.extract_strided_slice %0 {offsets = [1, 0], sizes = [1, 128], strides = [1, 1]} : vector<16x128xf32> to vector<1x128xf32>
    %55 = vector.extract_strided_slice %0 {offsets = [2, 0], sizes = [1, 128], strides = [1, 1]} : vector<16x128xf32> to vector<1x128xf32>
    %c8_i32 = arith.constant 8 : i32
    %56 = tpu.dynamic_rotate %53 by %c8_i32 dim 1 : vector<32x128xf32>, i32 -> vector<32x128xf32>
    %57 = arith.addf %53, %56 : vector<32x128xf32>
    %c16_i32_24 = arith.constant 16 : i32
    %58 = tpu.dynamic_rotate %57 by %c16_i32_24 dim 1 : vector<32x128xf32>, i32 -> vector<32x128xf32>
    %59 = arith.addf %57, %58 : vector<32x128xf32>
    %c32_i32 = arith.constant 32 : i32
    %60 = tpu.dynamic_rotate %59 by %c32_i32 dim 1 : vector<32x128xf32>, i32 -> vector<32x128xf32>
    %61 = arith.addf %59, %60 : vector<32x128xf32>
    %c64_i32 = arith.constant 64 : i32
    %62 = tpu.dynamic_rotate %61 by %c64_i32 dim 1 : vector<32x128xf32>, i32 -> vector<32x128xf32>
    %63 = arith.addf %61, %62 : vector<32x128xf32>
    %cst_25 = arith.constant dense<0.000000e+00> : vector<128xf32>
    %64 = vector.multi_reduction <add>, %63, %cst_25 [0] : vector<32x128xf32> to vector<128xf32>
    %65 = vector.shape_cast %64 : vector<128xf32> to vector<1x128xf32>
    %cst_26 = arith.constant 0.001953125 : f32
    %66 = vector.broadcast %cst_26 : f32 to vector<1x128xf32>
    %67 = arith.mulf %65, %66 : vector<1x128xf32>
    %68 = vector.broadcast %67 : vector<1x128xf32> to vector<32x128xf32>
    %69 = arith.subf %53, %68 : vector<32x128xf32>
    %70 = arith.mulf %69, %69 : vector<32x128xf32>
    %c8_i32_27 = arith.constant 8 : i32
    %71 = tpu.dynamic_rotate %70 by %c8_i32_27 dim 1 : vector<32x128xf32>, i32 -> vector<32x128xf32>
    %72 = arith.addf %70, %71 : vector<32x128xf32>
    %c16_i32_28 = arith.constant 16 : i32
    %73 = tpu.dynamic_rotate %72 by %c16_i32_28 dim 1 : vector<32x128xf32>, i32 -> vector<32x128xf32>
    %74 = arith.addf %72, %73 : vector<32x128xf32>
    %c32_i32_29 = arith.constant 32 : i32
    %75 = tpu.dynamic_rotate %74 by %c32_i32_29 dim 1 : vector<32x128xf32>, i32 -> vector<32x128xf32>
    %76 = arith.addf %74, %75 : vector<32x128xf32>
    %c64_i32_30 = arith.constant 64 : i32
    %77 = tpu.dynamic_rotate %76 by %c64_i32_30 dim 1 : vector<32x128xf32>, i32 -> vector<32x128xf32>
    %78 = arith.addf %76, %77 : vector<32x128xf32>
    %cst_31 = arith.constant dense<0.000000e+00> : vector<128xf32>
    %79 = vector.multi_reduction <add>, %78, %cst_31 [0] : vector<32x128xf32> to vector<128xf32>
    %80 = vector.shape_cast %79 : vector<128xf32> to vector<1x128xf32>
    %cst_32 = arith.constant 0.001953125 : f32
    %81 = vector.broadcast %cst_32 : f32 to vector<1x128xf32>
    %82 = arith.mulf %80, %81 : vector<1x128xf32>
    %cst_33 = arith.constant 9.99999974E-6 : f32
    %83 = vector.broadcast %cst_33 : f32 to vector<1x128xf32>
    %84 = arith.addf %82, %83 : vector<1x128xf32>
    %85 = math.rsqrt %84 : vector<1x128xf32>
    %86 = arith.mulf %54, %85 : vector<1x128xf32>
    %87 = vector.broadcast %86 : vector<1x128xf32> to vector<32x128xf32>
    %88 = arith.mulf %69, %87 : vector<32x128xf32>
    %89 = vector.broadcast %55 : vector<1x128xf32> to vector<32x128xf32>
    %90 = arith.addf %88, %89 : vector<32x128xf32>
    %c1 = arith.constant 1 : index
    %c0_34 = arith.constant 0 : index
    %c0_35 = arith.constant 0 : index
    %91 = vector.load %arg4[%c1, %c0_34, %c0_35] : memref<3x128x128xf32, #tpu.memory_space<vmem>>, vector<1x128x128xf32>
    %92 = vector.shape_cast %91 : vector<1x128x128xf32> to vector<128x128xf32>
    %cst_36 = arith.constant dense<0.000000e+00> : vector<32x128xf32>
    %93 = tpu.matmul %47, %92, %cst_36 {dimension_numbers = #tpu.dot_dimension_numbers<[1], [0], [0], [1], [0, 0, 1, 1], [], []>} : vector<32x128xf32>, vector<128x128xf32>, vector<32x128xf32> -> vector<32x128xf32>
    %94 = vector.extract_strided_slice %0 {offsets = [3, 0], sizes = [1, 128], strides = [1, 1]} : vector<16x128xf32> to vector<1x128xf32>
    %95 = vector.broadcast %94 : vector<1x128xf32> to vector<32x128xf32>
    %96 = arith.addf %93, %95 : vector<32x128xf32>
    %97 = vector.extract_strided_slice %0 {offsets = [4, 0], sizes = [1, 128], strides = [1, 1]} : vector<16x128xf32> to vector<1x128xf32>
    %98 = vector.extract_strided_slice %0 {offsets = [5, 0], sizes = [1, 128], strides = [1, 1]} : vector<16x128xf32> to vector<1x128xf32>
    %c8_i32_37 = arith.constant 8 : i32
    %99 = tpu.dynamic_rotate %96 by %c8_i32_37 dim 1 : vector<32x128xf32>, i32 -> vector<32x128xf32>
    %100 = arith.addf %96, %99 : vector<32x128xf32>
    %c16_i32_38 = arith.constant 16 : i32
    %101 = tpu.dynamic_rotate %100 by %c16_i32_38 dim 1 : vector<32x128xf32>, i32 -> vector<32x128xf32>
    %102 = arith.addf %100, %101 : vector<32x128xf32>
    %c32_i32_39 = arith.constant 32 : i32
    %103 = tpu.dynamic_rotate %102 by %c32_i32_39 dim 1 : vector<32x128xf32>, i32 -> vector<32x128xf32>
    %104 = arith.addf %102, %103 : vector<32x128xf32>
    %c64_i32_40 = arith.constant 64 : i32
    %105 = tpu.dynamic_rotate %104 by %c64_i32_40 dim 1 : vector<32x128xf32>, i32 -> vector<32x128xf32>
    %106 = arith.addf %104, %105 : vector<32x128xf32>
    %cst_41 = arith.constant dense<0.000000e+00> : vector<128xf32>
    %107 = vector.multi_reduction <add>, %106, %cst_41 [0] : vector<32x128xf32> to vector<128xf32>
    %108 = vector.shape_cast %107 : vector<128xf32> to vector<1x128xf32>
    %cst_42 = arith.constant 0.001953125 : f32
    %109 = vector.broadcast %cst_42 : f32 to vector<1x128xf32>
    %110 = arith.mulf %108, %109 : vector<1x128xf32>
    %111 = vector.broadcast %110 : vector<1x128xf32> to vector<32x128xf32>
    %112 = arith.subf %96, %111 : vector<32x128xf32>
    %113 = arith.mulf %112, %112 : vector<32x128xf32>
    %c8_i32_43 = arith.constant 8 : i32
    %114 = tpu.dynamic_rotate %113 by %c8_i32_43 dim 1 : vector<32x128xf32>, i32 -> vector<32x128xf32>
    %115 = arith.addf %113, %114 : vector<32x128xf32>
    %c16_i32_44 = arith.constant 16 : i32
    %116 = tpu.dynamic_rotate %115 by %c16_i32_44 dim 1 : vector<32x128xf32>, i32 -> vector<32x128xf32>
    %117 = arith.addf %115, %116 : vector<32x128xf32>
    %c32_i32_45 = arith.constant 32 : i32
    %118 = tpu.dynamic_rotate %117 by %c32_i32_45 dim 1 : vector<32x128xf32>, i32 -> vector<32x128xf32>
    %119 = arith.addf %117, %118 : vector<32x128xf32>
    %c64_i32_46 = arith.constant 64 : i32
    %120 = tpu.dynamic_rotate %119 by %c64_i32_46 dim 1 : vector<32x128xf32>, i32 -> vector<32x128xf32>
    %121 = arith.addf %119, %120 : vector<32x128xf32>
    %cst_47 = arith.constant dense<0.000000e+00> : vector<128xf32>
    %122 = vector.multi_reduction <add>, %121, %cst_47 [0] : vector<32x128xf32> to vector<128xf32>
    %123 = vector.shape_cast %122 : vector<128xf32> to vector<1x128xf32>
    %cst_48 = arith.constant 0.001953125 : f32
    %124 = vector.broadcast %cst_48 : f32 to vector<1x128xf32>
    %125 = arith.mulf %123, %124 : vector<1x128xf32>
    %cst_49 = arith.constant 9.99999974E-6 : f32
    %126 = vector.broadcast %cst_49 : f32 to vector<1x128xf32>
    %127 = arith.addf %125, %126 : vector<1x128xf32>
    %128 = math.rsqrt %127 : vector<1x128xf32>
    %129 = arith.mulf %97, %128 : vector<1x128xf32>
    %130 = vector.broadcast %129 : vector<1x128xf32> to vector<32x128xf32>
    %131 = arith.mulf %112, %130 : vector<32x128xf32>
    %132 = vector.broadcast %98 : vector<1x128xf32> to vector<32x128xf32>
    %133 = arith.addf %131, %132 : vector<32x128xf32>
    %134 = arith.addf %90, %133 : vector<32x128xf32>
    %cst_50 = arith.constant 0.000000e+00 : f32
    %135 = vector.broadcast %cst_50 : f32 to vector<32x128xf32>
    %136 = arith.maximumf %134, %135 : vector<32x128xf32>
    %c2 = arith.constant 2 : index
    %c0_51 = arith.constant 0 : index
    %c0_52 = arith.constant 0 : index
    %137 = vector.load %arg4[%c2, %c0_51, %c0_52] : memref<3x128x128xf32, #tpu.memory_space<vmem>>, vector<1x128x128xf32>
    %138 = vector.shape_cast %137 : vector<1x128x128xf32> to vector<128x128xf32>
    %cst_53 = arith.constant dense<0.000000e+00> : vector<32x128xf32>
    %139 = tpu.matmul %136, %138, %cst_53 {dimension_numbers = #tpu.dot_dimension_numbers<[1], [0], [0], [1], [0, 0, 1, 1], [], []>} : vector<32x128xf32>, vector<128x128xf32>, vector<32x128xf32> -> vector<32x128xf32>
    %140 = vector.extract_strided_slice %0 {offsets = [6, 0], sizes = [1, 128], strides = [1, 1]} : vector<16x128xf32> to vector<1x128xf32>
    %141 = vector.broadcast %140 : vector<1x128xf32> to vector<32x128xf32>
    %142 = arith.addf %139, %141 : vector<32x128xf32>
    %143 = vector.extract_strided_slice %0 {offsets = [7, 0], sizes = [1, 128], strides = [1, 1]} : vector<16x128xf32> to vector<1x128xf32>
    %144 = vector.extract_strided_slice %0 {offsets = [8, 0], sizes = [1, 128], strides = [1, 1]} : vector<16x128xf32> to vector<1x128xf32>
    %c8_i32_54 = arith.constant 8 : i32
    %145 = tpu.dynamic_rotate %142 by %c8_i32_54 dim 1 : vector<32x128xf32>, i32 -> vector<32x128xf32>
    %146 = arith.addf %142, %145 : vector<32x128xf32>
    %c16_i32_55 = arith.constant 16 : i32
    %147 = tpu.dynamic_rotate %146 by %c16_i32_55 dim 1 : vector<32x128xf32>, i32 -> vector<32x128xf32>
    %148 = arith.addf %146, %147 : vector<32x128xf32>
    %c32_i32_56 = arith.constant 32 : i32
    %149 = tpu.dynamic_rotate %148 by %c32_i32_56 dim 1 : vector<32x128xf32>, i32 -> vector<32x128xf32>
    %150 = arith.addf %148, %149 : vector<32x128xf32>
    %c64_i32_57 = arith.constant 64 : i32
    %151 = tpu.dynamic_rotate %150 by %c64_i32_57 dim 1 : vector<32x128xf32>, i32 -> vector<32x128xf32>
    %152 = arith.addf %150, %151 : vector<32x128xf32>
    %cst_58 = arith.constant dense<0.000000e+00> : vector<128xf32>
    %153 = vector.multi_reduction <add>, %152, %cst_58 [0] : vector<32x128xf32> to vector<128xf32>
    %154 = vector.shape_cast %153 : vector<128xf32> to vector<1x128xf32>
    %cst_59 = arith.constant 0.001953125 : f32
    %155 = vector.broadcast %cst_59 : f32 to vector<1x128xf32>
    %156 = arith.mulf %154, %155 : vector<1x128xf32>
    %157 = vector.broadcast %156 : vector<1x128xf32> to vector<32x128xf32>
    %158 = arith.subf %142, %157 : vector<32x128xf32>
    %159 = arith.mulf %158, %158 : vector<32x128xf32>
    %c8_i32_60 = arith.constant 8 : i32
    %160 = tpu.dynamic_rotate %159 by %c8_i32_60 dim 1 : vector<32x128xf32>, i32 -> vector<32x128xf32>
    %161 = arith.addf %159, %160 : vector<32x128xf32>
    %c16_i32_61 = arith.constant 16 : i32
    %162 = tpu.dynamic_rotate %161 by %c16_i32_61 dim 1 : vector<32x128xf32>, i32 -> vector<32x128xf32>
    %163 = arith.addf %161, %162 : vector<32x128xf32>
    %c32_i32_62 = arith.constant 32 : i32
    %164 = tpu.dynamic_rotate %163 by %c32_i32_62 dim 1 : vector<32x128xf32>, i32 -> vector<32x128xf32>
    %165 = arith.addf %163, %164 : vector<32x128xf32>
    %c64_i32_63 = arith.constant 64 : i32
    %166 = tpu.dynamic_rotate %165 by %c64_i32_63 dim 1 : vector<32x128xf32>, i32 -> vector<32x128xf32>
    %167 = arith.addf %165, %166 : vector<32x128xf32>
    %cst_64 = arith.constant dense<0.000000e+00> : vector<128xf32>
    %168 = vector.multi_reduction <add>, %167, %cst_64 [0] : vector<32x128xf32> to vector<128xf32>
    %169 = vector.shape_cast %168 : vector<128xf32> to vector<1x128xf32>
    %cst_65 = arith.constant 0.001953125 : f32
    %170 = vector.broadcast %cst_65 : f32 to vector<1x128xf32>
    %171 = arith.mulf %169, %170 : vector<1x128xf32>
    %cst_66 = arith.constant 9.99999974E-6 : f32
    %172 = vector.broadcast %cst_66 : f32 to vector<1x128xf32>
    %173 = arith.addf %171, %172 : vector<1x128xf32>
    %174 = math.rsqrt %173 : vector<1x128xf32>
    %175 = arith.mulf %143, %174 : vector<1x128xf32>
    %176 = vector.broadcast %175 : vector<1x128xf32> to vector<32x128xf32>
    %177 = arith.mulf %158, %176 : vector<32x128xf32>
    %178 = vector.broadcast %144 : vector<1x128xf32> to vector<32x128xf32>
    %179 = arith.addf %177, %178 : vector<32x128xf32>
    %cst_67 = arith.constant 0.000000e+00 : f32
    %180 = vector.broadcast %cst_67 : f32 to vector<32x128xf32>
    %181 = arith.subf %180, %179 : vector<32x128xf32>
    %182 = math.exp %181 : vector<32x128xf32>
    %cst_68 = arith.constant 1.000000e+00 : f32
    %183 = vector.broadcast %cst_68 : f32 to vector<32x128xf32>
    %184 = arith.addf %183, %182 : vector<32x128xf32>
    %cst_69 = arith.constant 1.000000e+00 : f32
    %185 = vector.broadcast %cst_69 : f32 to vector<32x128xf32>
    %186 = arith.divf %185, %184 : vector<32x128xf32>
    %187 = arith.mulf %47, %186 : vector<32x128xf32>
    %188 = tpu.concatenate %46, %187 in 1 : vector<32x128xf32>, vector<32x128xf32> -> vector<32x256xf32>
    %c1_i32_70 = arith.constant 1 : i32
    %189 = tpu.dynamic_rotate %188 by %c1_i32_70 dim 0 : vector<32x256xf32>, i32 -> vector<32x256xf32>
    %190 = vector.broadcast %21 : vector<32x1xf32> to vector<32x256xf32>
    %191 = arith.mulf %189, %190 : vector<32x256xf32>
    %c31_i32 = arith.constant 31 : i32
    %192 = tpu.dynamic_rotate %188 by %c31_i32 dim 0 : vector<32x256xf32>, i32 -> vector<32x256xf32>
    %193 = vector.broadcast %41 : vector<32x1xf32> to vector<32x256xf32>
    %194 = arith.mulf %192, %193 : vector<32x256xf32>
    %c0_71 = arith.constant 0 : index
    %c0_72 = arith.constant 0 : index
    %c0_73 = arith.constant 0 : index
    %195 = vector.load %arg5[%c0_71, %c0_72, %c0_73] : memref<3x256x128xbf16, #tpu.memory_space<vmem>>, vector<1x256x128xbf16>
    %196 = vector.shape_cast %195 : vector<1x256x128xbf16> to vector<256x128xbf16>
    %197 = arith.truncf %191 : vector<32x256xf32> to vector<32x256xbf16>
    %cst_74 = arith.constant dense<0.000000e+00> : vector<32x128xf32>
    %198 = tpu.matmul %197, %196, %cst_74 {dimension_numbers = #tpu.dot_dimension_numbers<[1], [0], [0], [1], [0, 0, 1, 1], [], []>} : vector<32x256xbf16>, vector<256x128xbf16>, vector<32x128xf32> -> vector<32x128xf32>
    %c1_75 = arith.constant 1 : index
    %c0_76 = arith.constant 0 : index
    %c0_77 = arith.constant 0 : index
    %199 = vector.load %arg5[%c1_75, %c0_76, %c0_77] : memref<3x256x128xbf16, #tpu.memory_space<vmem>>, vector<1x256x128xbf16>
    %200 = vector.shape_cast %199 : vector<1x256x128xbf16> to vector<256x128xbf16>
    %201 = arith.truncf %188 : vector<32x256xf32> to vector<32x256xbf16>
    %cst_78 = arith.constant dense<0.000000e+00> : vector<32x128xf32>
    %202 = tpu.matmul %201, %200, %cst_78 {dimension_numbers = #tpu.dot_dimension_numbers<[1], [0], [0], [1], [0, 0, 1, 1], [], []>} : vector<32x256xbf16>, vector<256x128xbf16>, vector<32x128xf32> -> vector<32x128xf32>
    %203 = arith.addf %198, %202 : vector<32x128xf32>
    %c2_79 = arith.constant 2 : index
    %c0_80 = arith.constant 0 : index
    %c0_81 = arith.constant 0 : index
    %204 = vector.load %arg5[%c2_79, %c0_80, %c0_81] : memref<3x256x128xbf16, #tpu.memory_space<vmem>>, vector<1x256x128xbf16>
    %205 = vector.shape_cast %204 : vector<1x256x128xbf16> to vector<256x128xbf16>
    %206 = arith.truncf %194 : vector<32x256xf32> to vector<32x256xbf16>
    %cst_82 = arith.constant dense<0.000000e+00> : vector<32x128xf32>
    %207 = tpu.matmul %206, %205, %cst_82 {dimension_numbers = #tpu.dot_dimension_numbers<[1], [0], [0], [1], [0, 0, 1, 1], [], []>} : vector<32x256xbf16>, vector<256x128xbf16>, vector<32x128xf32> -> vector<32x128xf32>
    %208 = arith.addf %203, %207 : vector<32x128xf32>
    %209 = vector.extract_strided_slice %0 {offsets = [9, 0], sizes = [1, 128], strides = [1, 1]} : vector<16x128xf32> to vector<1x128xf32>
    %210 = vector.broadcast %209 : vector<1x128xf32> to vector<32x128xf32>
    %211 = arith.addf %208, %210 : vector<32x128xf32>
    %212 = vector.extract_strided_slice %0 {offsets = [10, 0], sizes = [1, 128], strides = [1, 1]} : vector<16x128xf32> to vector<1x128xf32>
    %213 = vector.extract_strided_slice %0 {offsets = [11, 0], sizes = [1, 128], strides = [1, 1]} : vector<16x128xf32> to vector<1x128xf32>
    %c8_i32_83 = arith.constant 8 : i32
    %214 = tpu.dynamic_rotate %211 by %c8_i32_83 dim 1 : vector<32x128xf32>, i32 -> vector<32x128xf32>
    %215 = arith.addf %211, %214 : vector<32x128xf32>
    %c16_i32_84 = arith.constant 16 : i32
    %216 = tpu.dynamic_rotate %215 by %c16_i32_84 dim 1 : vector<32x128xf32>, i32 -> vector<32x128xf32>
    %217 = arith.addf %215, %216 : vector<32x128xf32>
    %c32_i32_85 = arith.constant 32 : i32
    %218 = tpu.dynamic_rotate %217 by %c32_i32_85 dim 1 : vector<32x128xf32>, i32 -> vector<32x128xf32>
    %219 = arith.addf %217, %218 : vector<32x128xf32>
    %c64_i32_86 = arith.constant 64 : i32
    %220 = tpu.dynamic_rotate %219 by %c64_i32_86 dim 1 : vector<32x128xf32>, i32 -> vector<32x128xf32>
    %221 = arith.addf %219, %220 : vector<32x128xf32>
    %cst_87 = arith.constant dense<0.000000e+00> : vector<128xf32>
    %222 = vector.multi_reduction <add>, %221, %cst_87 [0] : vector<32x128xf32> to vector<128xf32>
    %223 = vector.shape_cast %222 : vector<128xf32> to vector<1x128xf32>
    %cst_88 = arith.constant 0.001953125 : f32
    %224 = vector.broadcast %cst_88 : f32 to vector<1x128xf32>
    %225 = arith.mulf %223, %224 : vector<1x128xf32>
    %226 = vector.broadcast %225 : vector<1x128xf32> to vector<32x128xf32>
    %227 = arith.subf %211, %226 : vector<32x128xf32>
    %228 = arith.mulf %227, %227 : vector<32x128xf32>
    %c8_i32_89 = arith.constant 8 : i32
    %229 = tpu.dynamic_rotate %228 by %c8_i32_89 dim 1 : vector<32x128xf32>, i32 -> vector<32x128xf32>
    %230 = arith.addf %228, %229 : vector<32x128xf32>
    %c16_i32_90 = arith.constant 16 : i32
    %231 = tpu.dynamic_rotate %230 by %c16_i32_90 dim 1 : vector<32x128xf32>, i32 -> vector<32x128xf32>
    %232 = arith.addf %230, %231 : vector<32x128xf32>
    %c32_i32_91 = arith.constant 32 : i32
    %233 = tpu.dynamic_rotate %232 by %c32_i32_91 dim 1 : vector<32x128xf32>, i32 -> vector<32x128xf32>
    %234 = arith.addf %232, %233 : vector<32x128xf32>
    %c64_i32_92 = arith.constant 64 : i32
    %235 = tpu.dynamic_rotate %234 by %c64_i32_92 dim 1 : vector<32x128xf32>, i32 -> vector<32x128xf32>
    %236 = arith.addf %234, %235 : vector<32x128xf32>
    %cst_93 = arith.constant dense<0.000000e+00> : vector<128xf32>
    %237 = vector.multi_reduction <add>, %236, %cst_93 [0] : vector<32x128xf32> to vector<128xf32>
    %238 = vector.shape_cast %237 : vector<128xf32> to vector<1x128xf32>
    %cst_94 = arith.constant 0.001953125 : f32
    %239 = vector.broadcast %cst_94 : f32 to vector<1x128xf32>
    %240 = arith.mulf %238, %239 : vector<1x128xf32>
    %cst_95 = arith.constant 9.99999974E-6 : f32
    %241 = vector.broadcast %cst_95 : f32 to vector<1x128xf32>
    %242 = arith.addf %240, %241 : vector<1x128xf32>
    %243 = math.rsqrt %242 : vector<1x128xf32>
    %244 = arith.mulf %212, %243 : vector<1x128xf32>
    %245 = vector.broadcast %244 : vector<1x128xf32> to vector<32x128xf32>
    %246 = arith.mulf %227, %245 : vector<32x128xf32>
    %247 = vector.broadcast %213 : vector<1x128xf32> to vector<32x128xf32>
    %248 = arith.addf %246, %247 : vector<32x128xf32>
    %cst_96 = arith.constant 0.000000e+00 : f32
    %249 = vector.broadcast %cst_96 : f32 to vector<32x128xf32>
    %250 = arith.maximumf %248, %249 : vector<32x128xf32>
    %c1_i32_97 = arith.constant 1 : i32
    %251 = tpu.dynamic_rotate %250 by %c1_i32_97 dim 0 : vector<32x128xf32>, i32 -> vector<32x128xf32>
    %252 = vector.broadcast %21 : vector<32x1xf32> to vector<32x128xf32>
    %253 = arith.mulf %251, %252 : vector<32x128xf32>
    %c31_i32_98 = arith.constant 31 : i32
    %254 = tpu.dynamic_rotate %250 by %c31_i32_98 dim 0 : vector<32x128xf32>, i32 -> vector<32x128xf32>
    %255 = vector.broadcast %41 : vector<32x1xf32> to vector<32x128xf32>
    %256 = arith.mulf %254, %255 : vector<32x128xf32>
    %c0_99 = arith.constant 0 : index
    %c0_100 = arith.constant 0 : index
    %c0_101 = arith.constant 0 : index
    %257 = vector.load %arg6[%c0_99, %c0_100, %c0_101] : memref<3x128x128xbf16, #tpu.memory_space<vmem>>, vector<1x128x128xbf16>
    %258 = vector.shape_cast %257 : vector<1x128x128xbf16> to vector<128x128xbf16>
    %259 = arith.truncf %253 : vector<32x128xf32> to vector<32x128xbf16>
    %cst_102 = arith.constant dense<0.000000e+00> : vector<32x128xf32>
    %260 = tpu.matmul %259, %258, %cst_102 {dimension_numbers = #tpu.dot_dimension_numbers<[1], [0], [0], [1], [0, 0, 1, 1], [], []>} : vector<32x128xbf16>, vector<128x128xbf16>, vector<32x128xf32> -> vector<32x128xf32>
    %c1_103 = arith.constant 1 : index
    %c0_104 = arith.constant 0 : index
    %c0_105 = arith.constant 0 : index
    %261 = vector.load %arg6[%c1_103, %c0_104, %c0_105] : memref<3x128x128xbf16, #tpu.memory_space<vmem>>, vector<1x128x128xbf16>
    %262 = vector.shape_cast %261 : vector<1x128x128xbf16> to vector<128x128xbf16>
    %263 = arith.truncf %250 : vector<32x128xf32> to vector<32x128xbf16>
    %cst_106 = arith.constant dense<0.000000e+00> : vector<32x128xf32>
    %264 = tpu.matmul %263, %262, %cst_106 {dimension_numbers = #tpu.dot_dimension_numbers<[1], [0], [0], [1], [0, 0, 1, 1], [], []>} : vector<32x128xbf16>, vector<128x128xbf16>, vector<32x128xf32> -> vector<32x128xf32>
    %265 = arith.addf %260, %264 : vector<32x128xf32>
    %c2_107 = arith.constant 2 : index
    %c0_108 = arith.constant 0 : index
    %c0_109 = arith.constant 0 : index
    %266 = vector.load %arg6[%c2_107, %c0_108, %c0_109] : memref<3x128x128xbf16, #tpu.memory_space<vmem>>, vector<1x128x128xbf16>
    %267 = vector.shape_cast %266 : vector<1x128x128xbf16> to vector<128x128xbf16>
    %268 = arith.truncf %256 : vector<32x128xf32> to vector<32x128xbf16>
    %cst_110 = arith.constant dense<0.000000e+00> : vector<32x128xf32>
    %269 = tpu.matmul %268, %267, %cst_110 {dimension_numbers = #tpu.dot_dimension_numbers<[1], [0], [0], [1], [0, 0, 1, 1], [], []>} : vector<32x128xbf16>, vector<128x128xbf16>, vector<32x128xf32> -> vector<32x128xf32>
    %270 = arith.addf %265, %269 : vector<32x128xf32>
    %271 = vector.extract_strided_slice %0 {offsets = [12, 0], sizes = [1, 128], strides = [1, 1]} : vector<16x128xf32> to vector<1x128xf32>
    %272 = vector.broadcast %271 : vector<1x128xf32> to vector<32x128xf32>
    %273 = arith.addf %270, %272 : vector<32x128xf32>
    %274 = vector.extract_strided_slice %0 {offsets = [13, 0], sizes = [1, 128], strides = [1, 1]} : vector<16x128xf32> to vector<1x128xf32>
    %275 = vector.extract_strided_slice %0 {offsets = [14, 0], sizes = [1, 128], strides = [1, 1]} : vector<16x128xf32> to vector<1x128xf32>
    %c8_i32_111 = arith.constant 8 : i32
    %276 = tpu.dynamic_rotate %273 by %c8_i32_111 dim 1 : vector<32x128xf32>, i32 -> vector<32x128xf32>
    %277 = arith.addf %273, %276 : vector<32x128xf32>
    %c16_i32_112 = arith.constant 16 : i32
    %278 = tpu.dynamic_rotate %277 by %c16_i32_112 dim 1 : vector<32x128xf32>, i32 -> vector<32x128xf32>
    %279 = arith.addf %277, %278 : vector<32x128xf32>
    %c32_i32_113 = arith.constant 32 : i32
    %280 = tpu.dynamic_rotate %279 by %c32_i32_113 dim 1 : vector<32x128xf32>, i32 -> vector<32x128xf32>
    %281 = arith.addf %279, %280 : vector<32x128xf32>
    %c64_i32_114 = arith.constant 64 : i32
    %282 = tpu.dynamic_rotate %281 by %c64_i32_114 dim 1 : vector<32x128xf32>, i32 -> vector<32x128xf32>
    %283 = arith.addf %281, %282 : vector<32x128xf32>
    %cst_115 = arith.constant dense<0.000000e+00> : vector<128xf32>
    %284 = vector.multi_reduction <add>, %283, %cst_115 [0] : vector<32x128xf32> to vector<128xf32>
    %285 = vector.shape_cast %284 : vector<128xf32> to vector<1x128xf32>
    %cst_116 = arith.constant 0.001953125 : f32
    %286 = vector.broadcast %cst_116 : f32 to vector<1x128xf32>
    %287 = arith.mulf %285, %286 : vector<1x128xf32>
    %288 = vector.broadcast %287 : vector<1x128xf32> to vector<32x128xf32>
    %289 = arith.subf %273, %288 : vector<32x128xf32>
    %290 = arith.mulf %289, %289 : vector<32x128xf32>
    %c8_i32_117 = arith.constant 8 : i32
    %291 = tpu.dynamic_rotate %290 by %c8_i32_117 dim 1 : vector<32x128xf32>, i32 -> vector<32x128xf32>
    %292 = arith.addf %290, %291 : vector<32x128xf32>
    %c16_i32_118 = arith.constant 16 : i32
    %293 = tpu.dynamic_rotate %292 by %c16_i32_118 dim 1 : vector<32x128xf32>, i32 -> vector<32x128xf32>
    %294 = arith.addf %292, %293 : vector<32x128xf32>
    %c32_i32_119 = arith.constant 32 : i32
    %295 = tpu.dynamic_rotate %294 by %c32_i32_119 dim 1 : vector<32x128xf32>, i32 -> vector<32x128xf32>
    %296 = arith.addf %294, %295 : vector<32x128xf32>
    %c64_i32_120 = arith.constant 64 : i32
    %297 = tpu.dynamic_rotate %296 by %c64_i32_120 dim 1 : vector<32x128xf32>, i32 -> vector<32x128xf32>
    %298 = arith.addf %296, %297 : vector<32x128xf32>
    %cst_121 = arith.constant dense<0.000000e+00> : vector<128xf32>
    %299 = vector.multi_reduction <add>, %298, %cst_121 [0] : vector<32x128xf32> to vector<128xf32>
    %300 = vector.shape_cast %299 : vector<128xf32> to vector<1x128xf32>
    %cst_122 = arith.constant 0.001953125 : f32
    %301 = vector.broadcast %cst_122 : f32 to vector<1x128xf32>
    %302 = arith.mulf %300, %301 : vector<1x128xf32>
    %cst_123 = arith.constant 9.99999974E-6 : f32
    %303 = vector.broadcast %cst_123 : f32 to vector<1x128xf32>
    %304 = arith.addf %302, %303 : vector<1x128xf32>
    %305 = math.rsqrt %304 : vector<1x128xf32>
    %306 = arith.mulf %274, %305 : vector<1x128xf32>
    %307 = vector.broadcast %306 : vector<1x128xf32> to vector<32x128xf32>
    %308 = arith.mulf %289, %307 : vector<32x128xf32>
    %309 = vector.broadcast %275 : vector<1x128xf32> to vector<32x128xf32>
    %310 = arith.addf %308, %309 : vector<32x128xf32>
    %cst_124 = arith.constant 0.000000e+00 : f32
    %311 = vector.broadcast %cst_124 : f32 to vector<32x128xf32>
    %312 = arith.maximumf %310, %311 : vector<32x128xf32>
    %c0_125 = arith.constant 0 : index
    %c0_126 = arith.constant 0 : index
    %313 = vector.load %arg8[%c0_125, %c0_126] : memref<32x128xf32, #tpu.memory_space<vmem>>, vector<32x128xf32>
    tpu.vector_store %arg8[%c0_125, %c0_126], %312 {strides = array<i32>} : memref<32x128xf32, #tpu.memory_space<vmem>>, vector<32x128xf32>,
    return
  }
}

</mosaic_0001>

<llo_original>
// kernel: up_block_forward.1
$region0: #{up_block_forward.1}
  #allocation0 [shape = 'u32[]', space=smem, size = 0x4, offset = 0x4, fixed_abs, tag = 'smem constant byte address 0x4 - core index']
  #allocation1 [shape = 'u32[144,128]{1,0:T(1,128)}', space=vmem, size = 0x12000, scoped, tag = 'internal scratch']
  %s0 = inlined_call_operand.vmem [shape: f32[16,64], index: 0, kind: input, shape index: {}]
  %s1 = inlined_call_operand.vmem [shape: f32[32,128], index: 1, kind: input, shape index: {}]
  %s2 = inlined_call_operand.vmem [shape: f32[32,16], index: 2, kind: input, shape index: {}]
  %s3 = inlined_call_operand.vmem [shape: f32[64,128], index: 3, kind: input, shape index: {}]
  %s4 = inlined_call_operand.vmem [shape: f32[3,128,128], index: 4, kind: input, shape index: {}]
  %s5 = inlined_call_operand.vmem [shape: bf16[3,256,128], index: 5, kind: input, shape index: {}]
  %s6 = inlined_call_operand.vmem [shape: bf16[3,128,128], index: 6, kind: input, shape index: {}]
  %s7 = inlined_call_operand.vmem [shape: f32[16,128], index: 7, kind: input, shape index: {}]
  %s8 = inlined_call_operand.vmem [shape: f32[32,128], index: 8, kind: output, shape index: {}]
  %s9 = sld [smem:[#allocation0]]
  $region42: #{up_block_forward.1} parent=0
    _
  %s11 = ssub.s32 1, %s9
  %s12 = scalar_select 0, %s11, %s9
  // Predicated region
  $region2: #{up_block_forward.1} parent=0 // pred_check
    _
  $region3: #{up_block_forward.1} parent=0 // pred_check_branch
    %14 = sbr.rel (0) target = $region5
  $region4: #{up_block_forward.1} parent=0 // pred_region
    _
  $region5: #{up_block_forward.1} parent=0 // pred_fallthru
    _
  // Predicated region
  $region6: #{up_block_forward.1} parent=0 // pred_check
    _
  $region7: #{up_block_forward.1} parent=0 // pred_check_branch
    %16 = sbr.rel (0) target = $region9
  $region8: #{up_block_forward.1} parent=0 // pred_region
    _
  $region9: #{up_block_forward.1} parent=0 // pred_fallthru
    _
  // Predicated region
  $region10: #{up_block_forward.1} parent=0 // pred_check
    _
  $region11: #{up_block_forward.1} parent=0 // pred_check_branch
    %18 = sbr.rel (0) target = $region13
  $region12: #{up_block_forward.1} parent=0 // pred_region
    _
  $region13: #{up_block_forward.1} parent=0 // pred_fallthru
    _
  // Predicated region
  $region14: #{up_block_forward.1} parent=0 // pred_check
    _
  $region15: #{up_block_forward.1} parent=0 // pred_check_branch
    %20 = sbr.rel (0) target = $region17
  $region16: #{up_block_forward.1} parent=0 // pred_region
    _
  $region17: #{up_block_forward.1} parent=0 // pred_fallthru
    _
  // Predicated region
  $region18: #{up_block_forward.1} parent=0 // pred_check
    _
  $region19: #{up_block_forward.1} parent=0 // pred_check_branch
    %22 = sbr.rel (0) target = $region21
  $region20: #{up_block_forward.1} parent=0 // pred_region
    _
  $region21: #{up_block_forward.1} parent=0 // pred_fallthru
    _
  // Predicated region
  $region22: #{up_block_forward.1} parent=0 // pred_check
    _
  $region23: #{up_block_forward.1} parent=0 // pred_check_branch
    %24 = sbr.rel (0) target = $region25
  $region24: #{up_block_forward.1} parent=0 // pred_region
    _
  $region25: #{up_block_forward.1} parent=0 // pred_fallthru
    _
  // Predicated region
  $region26: #{up_block_forward.1} parent=0 // pred_check
    _
  $region27: #{up_block_forward.1} parent=0 // pred_check_branch
    %26 = sbr.rel (0) target = $region29
  $region28: #{up_block_forward.1} parent=0 // pred_region
    _
  $region29: #{up_block_forward.1} parent=0 // pred_fallthru
    _
  // Predicated region
  $region30: #{up_block_forward.1} parent=0 // pred_check
    _
  $region31: #{up_block_forward.1} parent=0 // pred_check_branch
    %28 = sbr.rel (0) target = $region33
  $region32: #{up_block_forward.1} parent=0 // pred_region
    _
  $region33: #{up_block_forward.1} parent=0 // pred_fallthru
    _
  %v30 = vld [vmem:[%s7] sm:$0xff]
  %v31 = vld [vmem:[%s7 + $0x8] sm:$0xff]
  %v32 = vlaneseq
  %v33 = vshrl.u32 %v32, 7
  %v34 = vadd.s32 %v33, 8
  %v35 = vadd.s32 %v33, 16
  %v36 = vadd.s32 %v33, 24
  %vm37 = vcmp.lt.s32.totalorder %v33, 0
  %v38 = vsub.s32 0, %v33
  %v39 = vsel %vm37, %v38, %v33
  %v40 = vshrl.u32 %v39, 4
  %v41 = vand.u32 %v39, 15
  %v42 = vsub.s32 0, %v41
  %v43 = vsel %vm37, %v42, %v41
  %vm44 = vcmp.lt.s32.totalorder %v34, 0
  %v45 = vsub.s32 0, %v34
  %v46 = vsel %vm44, %v45, %v34
  %v47 = vshrl.u32 %v46, 4
  %v48 = vand.u32 %v46, 15
  %v49 = vsub.s32 0, %v48
  %v50 = vsel %vm44, %v49, %v48
  %vm51 = vcmp.lt.s32.totalorder %v35, 0
  %v52 = vsub.s32 0, %v35
  %v53 = vsel %vm51, %v52, %v35
  %v54 = vshrl.u32 %v53, 4
  %v55 = vand.u32 %v53, 15
  %v56 = vsub.s32 0, %v55
  %v57 = vsel %vm51, %v56, %v55
  %vm58 = vcmp.lt.s32.totalorder %v36, 0
  %v59 = vsub.s32 0, %v36
  %v60 = vsel %vm58, %v59, %v36
  %v61 = vshrl.u32 %v60, 4
  %v62 = vand.u32 %v60, 15
  %v63 = vsub.s32 0, %v62
  %v64 = vsel %vm58, %v63, %v62
  %vm65 = vcmp.ne.s32.totalorder %v43, 0
  %vm66 = vcmp.ne.s32.totalorder %v50, 0
  %vm67 = vcmp.ne.s32.totalorder %v57, 0
  %vm68 = vcmp.ne.s32.totalorder %v64, 0
  %vm69 = vcmp.lt.s32.totalorder %v43, 0
  %vm70 = vcmp.lt.s32.totalorder %v50, 0
  %vm71 = vcmp.lt.s32.totalorder %v57, 0
  %vm72 = vcmp.lt.s32.totalorder %v64, 0
  %vm73 = vmand %vm69, %vm65
  %vm74 = vmand %vm70, %vm66
  %vm75 = vmand %vm71, %vm67
  %vm76 = vmand %vm72, %vm68
  %v77 = vadd.s32 %v43, 16
  %v78 = vadd.s32 %v50, 16
  %v79 = vadd.s32 %v57, 16
  %v80 = vadd.s32 %v64, 16
  %v81 = vsel %vm73, %v77, %v43
  %v82 = vsel %vm74, %v78, %v50
  %v83 = vsel %vm75, %v79, %v57
  %v84 = vsel %vm76, %v80, %v64
  %vm85 = vcmp.ne.s32.totalorder %v81, 0
  %vm86 = vcmp.ne.s32.totalorder %v82, 0
  %vm87 = vcmp.ne.s32.totalorder %v83, 0
  %vm88 = vcmp.ne.s32.totalorder %v84, 0
  %v89 = vsel %vm85, 1, 0
  %v90 = vsel %vm86, 1, 0
  %v91 = vsel %vm87, 1, 0
  %v92 = vsel %vm88, 1, 0
  %v93 = vcvt.s32.f32 %v89
  %v94 = vcvt.s32.f32 %v90
  %v95 = vcvt.s32.f32 %v91
  %v96 = vcvt.s32.f32 %v92
  %vm97 = vcmp.ne.s32.totalorder %v81, 15
  %vm98 = vcmp.ne.s32.totalorder %v82, 15
  %vm99 = vcmp.ne.s32.totalorder %v83, 15
  %vm100 = vcmp.ne.s32.totalorder %v84, 15
  %v101 = vsel %vm97, 1, 0
  %v102 = vsel %vm98, 1, 0
  %v103 = vsel %vm99, 1, 0
  %v104 = vsel %vm100, 1, 0
  %v105 = vcvt.s32.f32 %v101
  %v106 = vcvt.s32.f32 %v102
  %v107 = vcvt.s32.f32 %v103
  %v108 = vcvt.s32.f32 %v104
  %v109 = vld [vmem:[%s2] sm:$0xff]
  %v110 = vld [vmem:[%s2 + $0x8] sm:$0xff]
  %v111 = vld [vmem:[%s2 + $0x10] sm:$0xff]
  %v112 = vld [vmem:[%s2 + $0x18] sm:$0xff]
  %v113 = vld [vmem:[%s0] sm:$0xff]
  %v114 = vld [vmem:[%s0 + $0x8] sm:$0xff]
  %vm115 = vcmask 130048
  %v117 = vsel %vm115, %v109, 0
  %v120 = vsel %vm115, %v110, 0
  %v123 = vsel %vm115, %v111, 0
  %v126 = vsel %vm115, %v112, 0
  %128 = vmatprep.subr.mxu0 0.0
  %129 = vmatpush1.msra.mxu0 %v113
  %130 = vmatprep.subr.mxu0 0.0
  %131 = vmatpush1.msra.mxu0 %v114
  %132 = vmatprep.subr.mxu0 0.0
  %133 = vmatpush1.msra.mxu0 0.0
  %134 = vmatprep.subr.mxu0 0.0
  %135 = vmatpush1.msra.mxu0 0.0
  %136 = vmatprep.subr.mxu0 0.0
  %137 = vmatpush1.msra.mxu0 0.0
  %138 = vmatprep.subr.mxu0 0.0
  %139 = vmatpush1.msra.mxu0 0.0
  %140 = vmatprep.subr.mxu0 0.0
  %141 = vmatpush1.msra.mxu0 0.0
  %142 = vmatprep.subr.mxu0 0.0
  %143 = vmatpush1.msra.mxu0 0.0
  %144 = vmatprep.subr.mxu0 0.0
  %145 = vmatpush1.msra.mxu0 0.0
  %146 = vmatprep.subr.mxu0 0.0
  %147 = vmatpush1.msra.mxu0 0.0
  %148 = vmatprep.subr.mxu0 0.0
  %149 = vmatpush1.msra.mxu0 0.0
  %150 = vmatprep.subr.mxu0 0.0
  %151 = vmatpush1.msra.mxu0 0.0
  %152 = vmatprep.subr.mxu0 0.0
  %153 = vmatpush1.msra.mxu0 0.0
  %154 = vmatprep.subr.mxu0 0.0
  %155 = vmatpush1.msra.mxu0 0.0
  %156 = vmatprep.subr.mxu0 0.0
  %157 = vmatpush1.msra.mxu0 0.0
  %158 = vmatprep.subr.mxu0 0.0
  %159 = vmatpush1.msra.mxu0 0.0
  %160 = vmatprep.subr.mxu0 0.0
  %161 = vmatpush1.msra.mxu0 0.0
  %162 = vmatprep.subr.mxu0 0.0
  %163 = vmatpush1.msra.mxu0 0.0
  %164 = vmatprep.subr.mxu0 0.0
  %165 = vmatpush1.msra.mxu0 0.0
  %166 = vmatprep.subr.mxu0 0.0
  %167 = vmatpush1.msra.mxu0 0.0
  %168 = vmatprep.subr.mxu0 0.0
  %169 = vmatpush1.msra.mxu0 0.0
  %170 = vmatprep.subr.mxu0 0.0
  %171 = vmatpush1.msra.mxu0 0.0
  %172 = vmatprep.subr.mxu0 0.0
  %173 = vmatpush1.msra.mxu0 0.0
  %174 = vmatprep.subr.mxu0 0.0
  %175 = vmatpush1.msra.mxu0 0.0
  %176 = vmatprep.subr.mxu0 0.0
  %177 = vmatpush1.msra.mxu0 0.0
  %178 = vmatprep.subr.mxu0 0.0
  %179 = vmatpush1.msra.mxu0 0.0
  %180 = vmatprep.subr.mxu0 0.0
  %181 = vmatpush1.msra.mxu0 0.0
  %182 = vmatprep.subr.mxu0 0.0
  %183 = vmatpush1.msra.mxu0 0.0
  %184 = vmatprep.subr.mxu0 0.0
  %185 = vmatpush1.msra.mxu0 0.0
  %186 = vmatprep.subr.mxu0 0.0
  %187 = vmatpush1.msra.mxu0 0.0
  %188 = vmatprep.subr.mxu0 0.0
  %189 = vmatpush1.msra.mxu0 0.0
  %190 = vmatprep.subr.mxu0 0.0
  %191 = vmatpush1.msra.mxu0 0.0
  %192 = vmatprep.mubr.f32.mxu0 0.0
  %193 = vmatmul.mubr.f32.gmra.mrb[0].mxu0 %v117
  %v194 = vpop.f32.mrb[0].mxu0
  %v195 = vadd.f32 0.0, %v194
  %v196 = vpop.f32.mrb[0].mxu0
  %197 = vmatprep.mubr.f32.mxu0 0.0
  %198 = vmatmul.mubr.f32.gmra.mrb[0].mxu0 %v120
  %v199 = vpop.f32.mrb[0].mxu0
  %v200 = vadd.f32 0.0, %v199
  %v201 = vpop.f32.mrb[0].mxu0
  %202 = vmatprep.mubr.f32.mxu0 0.0
  %203 = vmatmul.mubr.f32.gmra.mrb[0].mxu0 %v123
  %v204 = vpop.f32.mrb[0].mxu0
  %v205 = vadd.f32 0.0, %v204
  %v206 = vpop.f32.mrb[0].mxu0
  %207 = vmatprep.mubr.f32.mxu0 0.0
  %208 = vmatmul.mubr.f32.gmra.mrb[0].mxu0 %v126
  %v209 = vpop.f32.mrb[0].mxu0
  %v210 = vadd.f32 0.0, %v209
  %v211 = vpop.f32.mrb[0].mxu0
  %212 = vdwg.mxu0
  %v213 = vld [vmem:[%s3] sm:$0xff]
  %v214 = vld [vmem:[%s3 + $0x8] sm:$0xff]
  %v215 = vld [vmem:[%s3 + $0x10] sm:$0xff]
  %v216 = vld [vmem:[%s3 + $0x18] sm:$0xff]
  %v217 = vld [vmem:[%s3 + $0x20] sm:$0xff]
  %v218 = vld [vmem:[%s3 + $0x28] sm:$0xff]
  %v219 = vld [vmem:[%s3 + $0x30] sm:$0xff]
  %v220 = vld [vmem:[%s3 + $0x38] sm:$0xff]
  %vm221 = vcmask 523264
  %v223 = vsel %vm221, %v195, 0
  %v226 = vsel %vm221, %v200, 0
  %v229 = vsel %vm221, %v205, 0
  %v232 = vsel %vm221, %v210, 0
  %234 = vmatprep.subr.mxu0 0.0
  %235 = vmatpush1.msra.mxu0 %v213
  %236 = vmatprep.subr.mxu0 0.0
  %237 = vmatpush1.msra.mxu0 %v214
  %238 = vmatprep.subr.mxu0 0.0
  %239 = vmatpush1.msra.mxu0 %v215
  %240 = vmatprep.subr.mxu0 0.0
  %241 = vmatpush1.msra.mxu0 %v216
  %242 = vmatprep.subr.mxu0 0.0
  %243 = vmatpush1.msra.mxu0 %v217
  %244 = vmatprep.subr.mxu0 0.0
  %245 = vmatpush1.msra.mxu0 %v218
  %246 = vmatprep.subr.mxu0 0.0
  %247 = vmatpush1.msra.mxu0 %v219
  %248 = vmatprep.subr.mxu0 0.0
  %249 = vmatpush1.msra.mxu0 %v220
  %250 = vmatprep.subr.mxu0 0.0
  %251 = vmatpush1.msra.mxu0 0.0
  %252 = vmatprep.subr.mxu0 0.0
  %253 = vmatpush1.msra.mxu0 0.0
  %254 = vmatprep.subr.mxu0 0.0
  %255 = vmatpush1.msra.mxu0 0.0
  %256 = vmatprep.subr.mxu0 0.0
  %257 = vmatpush1.msra.mxu0 0.0
  %258 = vmatprep.subr.mxu0 0.0
  %259 = vmatpush1.msra.mxu0 0.0
  %260 = vmatprep.subr.mxu0 0.0
  %261 = vmatpush1.msra.mxu0 0.0
  %262 = vmatprep.subr.mxu0 0.0
  %263 = vmatpush1.msra.mxu0 0.0
  %264 = vmatprep.subr.mxu0 0.0
  %265 = vmatpush1.msra.mxu0 0.0
  %266 = vmatprep.subr.mxu0 0.0
  %267 = vmatpush1.msra.mxu0 0.0
  %268 = vmatprep.subr.mxu0 0.0
  %269 = vmatpush1.msra.mxu0 0.0
  %270 = vmatprep.subr.mxu0 0.0
  %271 = vmatpush1.msra.mxu0 0.0
  %272 = vmatprep.subr.mxu0 0.0
  %273 = vmatpush1.msra.mxu0 0.0
  %274 = vmatprep.subr.mxu0 0.0
  %275 = vmatpush1.msra.mxu0 0.0
  %276 = vmatprep.subr.mxu0 0.0
  %277 = vmatpush1.msra.mxu0 0.0
  %278 = vmatprep.subr.mxu0 0.0
  %279 = vmatpush1.msra.mxu0 0.0
  %280 = vmatprep.subr.mxu0 0.0
  %281 = vmatpush1.msra.mxu0 0.0
  %282 = vmatprep.subr.mxu0 0.0
  %283 = vmatpush1.msra.mxu0 0.0
  %284 = vmatprep.subr.mxu0 0.0
  %285 = vmatpush1.msra.mxu0 0.0
  %286 = vmatprep.subr.mxu0 0.0
  %287 = vmatpush1.msra.mxu0 0.0
  %288 = vmatprep.subr.mxu0 0.0
  %289 = vmatpush1.msra.mxu0 0.0
  %290 = vmatprep.subr.mxu0 0.0
  %291 = vmatpush1.msra.mxu0 0.0
  %292 = vmatprep.subr.mxu0 0.0
  %293 = vmatpush1.msra.mxu0 0.0
  %294 = vmatprep.subr.mxu0 0.0
  %295 = vmatpush1.msra.mxu0 0.0
  %296 = vmatprep.subr.mxu0 0.0
  %297 = vmatpush1.msra.mxu0 0.0
  %298 = vmatprep.mubr.f32.mxu0 0.0
  %299 = vmatmul.mubr.f32.gmra.mrb[0].mxu0 %v223
  %v300 = vpop.f32.mrb[0].mxu0
  %v301 = vadd.f32 0.0, %v300
  %v302 = vpop.f32.mrb[0].mxu0
  %303 = vmatprep.mubr.f32.mxu0 0.0
  %304 = vmatmul.mubr.f32.gmra.mrb[0].mxu0 %v226
  %v305 = vpop.f32.mrb[0].mxu0
  %v306 = vadd.f32 0.0, %v305
  %v307 = vpop.f32.mrb[0].mxu0
  %308 = vmatprep.mubr.f32.mxu0 0.0
  %309 = vmatmul.mubr.f32.gmra.mrb[0].mxu0 %v229
  %v310 = vpop.f32.mrb[0].mxu0
  %v311 = vadd.f32 0.0, %v310
  %v312 = vpop.f32.mrb[0].mxu0
  %313 = vmatprep.mubr.f32.mxu0 0.0
  %314 = vmatmul.mubr.f32.gmra.mrb[0].mxu0 %v232
  %v315 = vpop.f32.mrb[0].mxu0
  %v316 = vadd.f32 0.0, %v315
  %v317 = vpop.f32.mrb[0].mxu0
  %318 = vdwg.mxu0
  %v319 = vld [vmem:[%s1] sm:$0xff]
  %v320 = vld [vmem:[%s1 + $0x8] sm:$0xff]
  %v321 = vld [vmem:[%s1 + $0x10] sm:$0xff]
  %v322 = vld [vmem:[%s1 + $0x18] sm:$0xff]
  %v323 = vld [vmem:[%s4] sm:$0xff]
  %v324 = vld [vmem:[%s4 + $0x8] sm:$0xff]
  %v325 = vld [vmem:[%s4 + $0x10] sm:$0xff]
  %v326 = vld [vmem:[%s4 + $0x18] sm:$0xff]
  %v327 = vld [vmem:[%s4 + $0x20] sm:$0xff]
  %v328 = vld [vmem:[%s4 + $0x28] sm:$0xff]
  %v329 = vld [vmem:[%s4 + $0x30] sm:$0xff]
  %v330 = vld [vmem:[%s4 + $0x38] sm:$0xff]
  %v331 = vld [vmem:[%s4 + $0x40] sm:$0xff]
  %v332 = vld [vmem:[%s4 + $0x48] sm:$0xff]
  %v333 = vld [vmem:[%s4 + $0x50] sm:$0xff]
  %v334 = vld [vmem:[%s4 + $0x58] sm:$0xff]
  %v335 = vld [vmem:[%s4 + $0x60] sm:$0xff]
  %v336 = vld [vmem:[%s4 + $0x68] sm:$0xff]
  %v337 = vld [vmem:[%s4 + $0x70] sm:$0xff]
  %v338 = vld [vmem:[%s4 + $0x78] sm:$0xff]
  %v339 = vlaneseq
  %v340 = vshrl.u32 %v339, 7
  %v341 = vsub.s32 0, %v340
  %v342 = vrot.slane %v30, %v341
  %343 = vmatprep.subr.mxu0 0.0
  %344 = vmatpush1.msra.mxu0 %v323
  %345 = vmatprep.subr.mxu0 0.0
  %346 = vmatpush1.msra.mxu0 %v324
  %347 = vmatprep.subr.mxu0 0.0
  %348 = vmatpush1.msra.mxu0 %v325
  %349 = vmatprep.subr.mxu0 0.0
  %350 = vmatpush1.msra.mxu0 %v326
  %351 = vmatprep.subr.mxu0 0.0
  %352 = vmatpush1.msra.mxu0 %v327
  %353 = vmatprep.subr.mxu0 0.0
  %354 = vmatpush1.msra.mxu0 %v328
  %355 = vmatprep.subr.mxu0 0.0
  %356 = vmatpush1.msra.mxu0 %v329
  %357 = vmatprep.subr.mxu0 0.0
  %358 = vmatpush1.msra.mxu0 %v330
  %359 = vmatprep.subr.mxu0 0.0
  %360 = vmatpush1.msra.mxu0 %v331
  %361 = vmatprep.subr.mxu0 0.0
  %362 = vmatpush1.msra.mxu0 %v332
  %363 = vmatprep.subr.mxu0 0.0
  %364 = vmatpush1.msra.mxu0 %v333
  %365 = vmatprep.subr.mxu0 0.0
  %366 = vmatpush1.msra.mxu0 %v334
  %367 = vmatprep.subr.mxu0 0.0
  %368 = vmatpush1.msra.mxu0 %v335
  %369 = vmatprep.subr.mxu0 0.0
  %370 = vmatpush1.msra.mxu0 %v336
  %371 = vmatprep.subr.mxu0 0.0
  %372 = vmatpush1.msra.mxu0 %v337
  %373 = vmatprep.subr.mxu0 0.0
  %374 = vmatpush1.msra.mxu0 %v338
  %375 = vmatprep.subr.mxu0 0.0
  %376 = vmatpush1.msra.mxu0 0.0
  %377 = vmatprep.subr.mxu0 0.0
  %378 = vmatpush1.msra.mxu0 0.0
  %379 = vmatprep.subr.mxu0 0.0
  %380 = vmatpush1.msra.mxu0 0.0
  %381 = vmatprep.subr.mxu0 0.0
  %382 = vmatpush1.msra.mxu0 0.0
  %383 = vmatprep.subr.mxu0 0.0
  %384 = vmatpush1.msra.mxu0 0.0
  %385 = vmatprep.subr.mxu0 0.0
  %386 = vmatpush1.msra.mxu0 0.0
  %387 = vmatprep.subr.mxu0 0.0
  %388 = vmatpush1.msra.mxu0 0.0
  %389 = vmatprep.subr.mxu0 0.0
  %390 = vmatpush1.msra.mxu0 0.0
  %391 = vmatprep.subr.mxu0 0.0
  %392 = vmatpush1.msra.mxu0 0.0
  %393 = vmatprep.subr.mxu0 0.0
  %394 = vmatpush1.msra.mxu0 0.0
  %395 = vmatprep.subr.mxu0 0.0
  %396 = vmatpush1.msra.mxu0 0.0
  %397 = vmatprep.subr.mxu0 0.0
  %398 = vmatpush1.msra.mxu0 0.0
  %399 = vmatprep.subr.mxu0 0.0
  %400 = vmatpush1.msra.mxu0 0.0
  %401 = vmatprep.subr.mxu0 0.0
  %402 = vmatpush1.msra.mxu0 0.0
  %403 = vmatprep.subr.mxu0 0.0
  %404 = vmatpush1.msra.mxu0 0.0
  %405 = vmatprep.subr.mxu0 0.0
  %406 = vmatpush1.msra.mxu0 0.0
  %407 = vmatprep.mubr.f32.mxu0 0.0
  %408 = vmatmul.mubr.f32.gmra.mrb[0].mxu0 %v301
  %v409 = vpop.f32.mrb[0].mxu0
  %v410 = vadd.f32 %v342, %v409
  %v411 = vpop.f32.mrb[0].mxu0
  %412 = vmatprep.mubr.f32.mxu0 0.0
  %413 = vmatmul.mubr.f32.gmra.mrb[0].mxu0 %v306
  %v414 = vpop.f32.mrb[0].mxu0
  %v415 = vadd.f32 %v342, %v414
  %v416 = vpop.f32.mrb[0].mxu0
  %417 = vmatprep.mubr.f32.mxu0 0.0
  %418 = vmatmul.mubr.f32.gmra.mrb[0].mxu0 %v311
  %v419 = vpop.f32.mrb[0].mxu0
  %v420 = vadd.f32 %v342, %v419
  %v421 = vpop.f32.mrb[0].mxu0
  %422 = vmatprep.mubr.f32.mxu0 0.0
  %423 = vmatmul.mubr.f32.gmra.mrb[0].mxu0 %v316
  %v424 = vpop.f32.mrb[0].mxu0
  %v425 = vadd.f32 %v342, %v424
  %v426 = vpop.f32.mrb[0].mxu0
  %427 = vdwg.mxu0
  %428 = vrot.lane.b32.xlu0 %v410, 8
  %v429 = vpop.permute.xlu0 %428
  %430 = vrot.lane.b32.xlu0 %v415, 8
  %v431 = vpop.permute.xlu0 %430
  %432 = vrot.lane.b32.xlu0 %v420, 8
  %v433 = vpop.permute.xlu0 %432
  %434 = vrot.lane.b32.xlu0 %v425, 8
  %v435 = vpop.permute.xlu0 %434
  %v436 = vadd.f32 %v410, %v429
  %v437 = vadd.f32 %v415, %v431
  %v438 = vadd.f32 %v420, %v433
  %v439 = vadd.f32 %v425, %v435
  %440 = vrot.lane.b32.xlu0 %v436, 16
  %v441 = vpop.permute.xlu0 %440
  %442 = vrot.lane.b32.xlu0 %v437, 16
  %v443 = vpop.permute.xlu0 %442
  %444 = vrot.lane.b32.xlu0 %v438, 16
  %v445 = vpop.permute.xlu0 %444
  %446 = vrot.lane.b32.xlu0 %v439, 16
  %v447 = vpop.permute.xlu0 %446
  %v448 = vadd.f32 %v436, %v441
  %v449 = vadd.f32 %v437, %v443
  %v450 = vadd.f32 %v438, %v445
  %v451 = vadd.f32 %v439, %v447
  %452 = vrot.lane.b32.xlu0 %v448, 32
  %v453 = vpop.permute.xlu0 %452
  %454 = vrot.lane.b32.xlu0 %v449, 32
  %v455 = vpop.permute.xlu0 %454
  %456 = vrot.lane.b32.xlu0 %v450, 32
  %v457 = vpop.permute.xlu0 %456
  %458 = vrot.lane.b32.xlu0 %v451, 32
  %v459 = vpop.permute.xlu0 %458
  %v460 = vadd.f32 %v448, %v453
  %v461 = vadd.f32 %v449, %v455
  %v462 = vadd.f32 %v450, %v457
  %v463 = vadd.f32 %v451, %v459
  %464 = vrot.lane.b32.xlu0 %v460, 64
  %v465 = vpop.permute.xlu0 %464
  %466 = vrot.lane.b32.xlu0 %v461, 64
  %v467 = vpop.permute.xlu0 %466
  %468 = vrot.lane.b32.xlu0 %v462, 64
  %v469 = vpop.permute.xlu0 %468
  %470 = vrot.lane.b32.xlu0 %v463, 64
  %v471 = vpop.permute.xlu0 %470
  %v472 = vadd.f32 %v460, %v465
  %v473 = vadd.f32 %v461, %v467
  %v474 = vadd.f32 %v462, %v469
  %v475 = vadd.f32 %v463, %v471
  %v476 = vadd.f32 %v472, %v473
  %v477 = vadd.f32 %v476, %v474
  %v478 = vadd.f32 %v477, %v475
  %v479 = vrot.slane %v478, 4
  %v480 = vadd.f32 %v478, %v479
  %v481 = vrot.slane %v480, 2
  %v482 = vadd.f32 %v480, %v481
  %v483 = vrot.slane %v482, 1
  %v484 = vadd.f32 %v482, %v483
  %v485 = vmul.f32 %v484, 0.001953125
  %v486 = vsub.f32 %v410, %v485
  %v487 = vsub.f32 %v415, %v485
  %v488 = vsub.f32 %v420, %v485
  %v489 = vsub.f32 %v425, %v485
  %v490 = vmul.f32 %v486, %v486
  %v491 = vmul.f32 %v487, %v487
  %v492 = vmul.f32 %v488, %v488
  %v493 = vmul.f32 %v489, %v489
  %494 = vrot.lane.b32.xlu0 %v490, 8
  %v495 = vpop.permute.xlu0 %494
  %496 = vrot.lane.b32.xlu0 %v491, 8
  %v497 = vpop.permute.xlu0 %496
  %498 = vrot.lane.b32.xlu0 %v492, 8
  %v499 = vpop.permute.xlu0 %498
  %500 = vrot.lane.b32.xlu0 %v493, 8
  %v501 = vpop.permute.xlu0 %500
  %v502 = vadd.f32 %v490, %v495
  %v503 = vadd.f32 %v491, %v497
  %v504 = vadd.f32 %v492, %v499
  %v505 = vadd.f32 %v493, %v501
  %506 = vrot.lane.b32.xlu0 %v502, 16
  %v507 = vpop.permute.xlu0 %506
  %508 = vrot.lane.b32.xlu0 %v503, 16
  %v509 = vpop.permute.xlu0 %508
  %510 = vrot.lane.b32.xlu0 %v504, 16
  %v511 = vpop.permute.xlu0 %510
  %512 = vrot.lane.b32.xlu0 %v505, 16
  %v513 = vpop.permute.xlu0 %512
  %v514 = vadd.f32 %v502, %v507
  %v515 = vadd.f32 %v503, %v509
  %v516 = vadd.f32 %v504, %v511
  %v517 = vadd.f32 %v505, %v513
  %518 = vrot.lane.b32.xlu0 %v514, 32
  %v519 = vpop.permute.xlu0 %518
  %520 = vrot.lane.b32.xlu0 %v515, 32
  %v521 = vpop.permute.xlu0 %520
  %522 = vrot.lane.b32.xlu0 %v516, 32
  %v523 = vpop.permute.xlu0 %522
  %524 = vrot.lane.b32.xlu0 %v517, 32
  %v525 = vpop.permute.xlu0 %524
  %v526 = vadd.f32 %v514, %v519
  %v527 = vadd.f32 %v515, %v521
  %v528 = vadd.f32 %v516, %v523
  %v529 = vadd.f32 %v517, %v525
  %530 = vrot.lane.b32.xlu0 %v526, 64
  %v531 = vpop.permute.xlu0 %530
  %532 = vrot.lane.b32.xlu0 %v527, 64
  %v533 = vpop.permute.xlu0 %532
  %534 = vrot.lane.b32.xlu0 %v528, 64
  %v535 = vpop.permute.xlu0 %534
  %536 = vrot.lane.b32.xlu0 %v529, 64
  %v537 = vpop.permute.xlu0 %536
  %v538 = vadd.f32 %v526, %v531
  %v539 = vadd.f32 %v527, %v533
  %v540 = vadd.f32 %v528, %v535
  %v541 = vadd.f32 %v529, %v537
  %v542 = vadd.f32 %v538, %v539
  %v543 = vadd.f32 %v542, %v540
  %v544 = vadd.f32 %v543, %v541
  %v545 = vrot.slane %v544, 4
  %v546 = vadd.f32 %v544, %v545
  %v547 = vrot.slane %v546, 2
  %v548 = vadd.f32 %v546, %v547
  %v549 = vrot.slane %v548, 1
  %v550 = vadd.f32 %v548, %v549
  %v551 = vmul.f32 %v550, 0.001953125
  %v552 = vadd.f32 %v551, 1e-05
  %v553 = vrsqrt.pop %v552
  %v554 = vmul.f32 %v30, %v553
  %v555 = vlaneseq
  %v556 = vshrl.u32 %v555, 7
  %v557 = vsub.s32 1, %v556
  %v558 = vrot.slane %v554, %v557
  %v559 = vmul.f32 %v486, %v558
  %v560 = vmul.f32 %v487, %v558
  %v561 = vmul.f32 %v488, %v558
  %v562 = vmul.f32 %v489, %v558
  %v563 = vlaneseq
  %v564 = vshrl.u32 %v563, 7
  %v565 = vsub.s32 2, %v564
  %v566 = vrot.slane %v30, %v565
  %v567 = vadd.f32 %v559, %v566
  %v568 = vadd.f32 %v560, %v566
  %v569 = vadd.f32 %v561, %v566
  %v570 = vadd.f32 %v562, %v566
  %s571 = scalar_lea.vmem %s4, 128
  %v572 = vld [vmem:[%s571] sm:$0xff]
  %v573 = vld [vmem:[%s571 + $0x8] sm:$0xff]
  %v574 = vld [vmem:[%s571 + $0x10] sm:$0xff]
  %v575 = vld [vmem:[%s571 + $0x18] sm:$0xff]
  %v576 = vld [vmem:[%s571 + $0x20] sm:$0xff]
  %v577 = vld [vmem:[%s571 + $0x28] sm:$0xff]
  %v578 = vld [vmem:[%s571 + $0x30] sm:$0xff]
  %v579 = vld [vmem:[%s571 + $0x38] sm:$0xff]
  %v580 = vld [vmem:[%s571 + $0x40] sm:$0xff]
  %v581 = vld [vmem:[%s571 + $0x48] sm:$0xff]
  %v582 = vld [vmem:[%s571 + $0x50] sm:$0xff]
  %v583 = vld [vmem:[%s571 + $0x58] sm:$0xff]
  %v584 = vld [vmem:[%s571 + $0x60] sm:$0xff]
  %v585 = vld [vmem:[%s571 + $0x68] sm:$0xff]
  %v586 = vld [vmem:[%s571 + $0x70] sm:$0xff]
  %v587 = vld [vmem:[%s571 + $0x78] sm:$0xff]
  %v588 = vlaneseq
  %v589 = vshrl.u32 %v588, 7
  %v590 = vsub.s32 3, %v589
  %v591 = vrot.slane %v30, %v590
  %592 = vmatprep.subr.mxu0 0.0
  %593 = vmatpush1.msra.mxu0 %v572
  %594 = vmatprep.subr.mxu0 0.0
  %595 = vmatpush1.msra.mxu0 %v573
  %596 = vmatprep.subr.mxu0 0.0
  %597 = vmatpush1.msra.mxu0 %v574
  %598 = vmatprep.subr.mxu0 0.0
  %599 = vmatpush1.msra.mxu0 %v575
  %600 = vmatprep.subr.mxu0 0.0
  %601 = vmatpush1.msra.mxu0 %v576
  %602 = vmatprep.subr.mxu0 0.0
  %603 = vmatpush1.msra.mxu0 %v577
  %604 = vmatprep.subr.mxu0 0.0
  %605 = vmatpush1.msra.mxu0 %v578
  %606 = vmatprep.subr.mxu0 0.0
  %607 = vmatpush1.msra.mxu0 %v579
  %608 = vmatprep.subr.mxu0 0.0
  %609 = vmatpush1.msra.mxu0 %v580
  %610 = vmatprep.subr.mxu0 0.0
  %611 = vmatpush1.msra.mxu0 %v581
  %612 = vmatprep.subr.mxu0 0.0
  %613 = vmatpush1.msra.mxu0 %v582
  %614 = vmatprep.subr.mxu0 0.0
  %615 = vmatpush1.msra.mxu0 %v583
  %616 = vmatprep.subr.mxu0 0.0
  %617 = vmatpush1.msra.mxu0 %v584
  %618 = vmatprep.subr.mxu0 0.0
  %619 = vmatpush1.msra.mxu0 %v585
  %620 = vmatprep.subr.mxu0 0.0
  %621 = vmatpush1.msra.mxu0 %v586
  %622 = vmatprep.subr.mxu0 0.0
  %623 = vmatpush1.msra.mxu0 %v587
  %624 = vmatprep.subr.mxu0 0.0
  %625 = vmatpush1.msra.mxu0 0.0
  %626 = vmatprep.subr.mxu0 0.0
  %627 = vmatpush1.msra.mxu0 0.0
  %628 = vmatprep.subr.mxu0 0.0
  %629 = vmatpush1.msra.mxu0 0.0
  %630 = vmatprep.subr.mxu0 0.0
  %631 = vmatpush1.msra.mxu0 0.0
  %632 = vmatprep.subr.mxu0 0.0
  %633 = vmatpush1.msra.mxu0 0.0
  %634 = vmatprep.subr.mxu0 0.0
  %635 = vmatpush1.msra.mxu0 0.0
  %636 = vmatprep.subr.mxu0 0.0
  %637 = vmatpush1.msra.mxu0 0.0
  %638 = vmatprep.subr.mxu0 0.0
  %639 = vmatpush1.msra.mxu0 0.0
  %640 = vmatprep.subr.mxu0 0.0
  %641 = vmatpush1.msra.mxu0 0.0
  %642 = vmatprep.subr.mxu0 0.0
  %643 = vmatpush1.msra.mxu0 0.0
  %644 = vmatprep.subr.mxu0 0.0
  %645 = vmatpush1.msra.mxu0 0.0
  %646 = vmatprep.subr.mxu0 0.0
  %647 = vmatpush1.msra.mxu0 0.0
  %648 = vmatprep.subr.mxu0 0.0
  %649 = vmatpush1.msra.mxu0 0.0
  %650 = vmatprep.subr.mxu0 0.0
  %651 = vmatpush1.msra.mxu0 0.0
  %652 = vmatprep.subr.mxu0 0.0
  %653 = vmatpush1.msra.mxu0 0.0
  %654 = vmatprep.subr.mxu0 0.0
  %655 = vmatpush1.msra.mxu0 0.0
  %656 = vmatprep.mubr.f32.mxu0 0.0
  %657 = vmatmul.mubr.f32.gmra.mrb[0].mxu0 %v319
  %v658 = vpop.f32.mrb[0].mxu0
  %v659 = vadd.f32 %v591, %v658
  %v660 = vpop.f32.mrb[0].mxu0
  %661 = vmatprep.mubr.f32.mxu0 0.0
  %662 = vmatmul.mubr.f32.gmra.mrb[0].mxu0 %v320
  %v663 = vpop.f32.mrb[0].mxu0
  %v664 = vadd.f32 %v591, %v663
  %v665 = vpop.f32.mrb[0].mxu0
  %666 = vmatprep.mubr.f32.mxu0 0.0
  %667 = vmatmul.mubr.f32.gmra.mrb[0].mxu0 %v321
  %v668 = vpop.f32.mrb[0].mxu0
  %v669 = vadd.f32 %v591, %v668
  %v670 = vpop.f32.mrb[0].mxu0
  %671 = vmatprep.mubr.f32.mxu0 0.0
  %672 = vmatmul.mubr.f32.gmra.mrb[0].mxu0 %v322
  %v673 = vpop.f32.mrb[0].mxu0
  %v674 = vadd.f32 %v591, %v673
  %v675 = vpop.f32.mrb[0].mxu0
  %676 = vdwg.mxu0
  %677 = vrot.lane.b32.xlu0 %v659, 8
  %v678 = vpop.permute.xlu0 %677
  %679 = vrot.lane.b32.xlu0 %v664, 8
  %v680 = vpop.permute.xlu0 %679
  %681 = vrot.lane.b32.xlu0 %v669, 8
  %v682 = vpop.permute.xlu0 %681
  %683 = vrot.lane.b32.xlu0 %v674, 8
  %v684 = vpop.permute.xlu0 %683
  %v685 = vadd.f32 %v659, %v678
  %v686 = vadd.f32 %v664, %v680
  %v687 = vadd.f32 %v669, %v682
  %v688 = vadd.f32 %v674, %v684
  %689 = vrot.lane.b32.xlu0 %v685, 16
  %v690 = vpop.permute.xlu0 %689
  %691 = vrot.lane.b32.xlu0 %v686, 16
  %v692 = vpop.permute.xlu0 %691
  %693 = vrot.lane.b32.xlu0 %v687, 16
  %v694 = vpop.permute.xlu0 %693
  %695 = vrot.lane.b32.xlu0 %v688, 16
  %v696 = vpop.permute.xlu0 %695
  %v697 = vadd.f32 %v685, %v690
  %v698 = vadd.f32 %v686, %v692
  %v699 = vadd.f32 %v687, %v694
  %v700 = vadd.f32 %v688, %v696
  %701 = vrot.lane.b32.xlu0 %v697, 32
  %v702 = vpop.permute.xlu0 %701
  %703 = vrot.lane.b32.xlu0 %v698, 32
  %v704 = vpop.permute.xlu0 %703
  %705 = vrot.lane.b32.xlu0 %v699, 32
  %v706 = vpop.permute.xlu0 %705
  %707 = vrot.lane.b32.xlu0 %v700, 32
  %v708 = vpop.permute.xlu0 %707
  %v709 = vadd.f32 %v697, %v702
  %v710 = vadd.f32 %v698, %v704
  %v711 = vadd.f32 %v699, %v706
  %v712 = vadd.f32 %v700, %v708
  %713 = vrot.lane.b32.xlu0 %v709, 64
  %v714 = vpop.permute.xlu0 %713
  %715 = vrot.lane.b32.xlu0 %v710, 64
  %v716 = vpop.permute.xlu0 %715
  %717 = vrot.lane.b32.xlu0 %v711, 64
  %v718 = vpop.permute.xlu0 %717
  %719 = vrot.lane.b32.xlu0 %v712, 64
  %v720 = vpop.permute.xlu0 %719
  %v721 = vadd.f32 %v709, %v714
  %v722 = vadd.f32 %v710, %v716
  %v723 = vadd.f32 %v711, %v718
  %v724 = vadd.f32 %v712, %v720
  %v725 = vadd.f32 %v721, %v722
  %v726 = vadd.f32 %v725, %v723
  %v727 = vadd.f32 %v726, %v724
  %v728 = vrot.slane %v727, 4
  %v729 = vadd.f32 %v727, %v728
  %v730 = vrot.slane %v729, 2
  %v731 = vadd.f32 %v729, %v730
  %v732 = vrot.slane %v731, 1
  %v733 = vadd.f32 %v731, %v732
  %v734 = vmul.f32 %v733, 0.001953125
  %v735 = vsub.f32 %v659, %v734
  %v736 = vsub.f32 %v664, %v734
  %v737 = vsub.f32 %v669, %v734
  %v738 = vsub.f32 %v674, %v734
  %v739 = vmul.f32 %v735, %v735
  %v740 = vmul.f32 %v736, %v736
  %v741 = vmul.f32 %v737, %v737
  %v742 = vmul.f32 %v738, %v738
  %743 = vrot.lane.b32.xlu0 %v739, 8
  %v744 = vpop.permute.xlu0 %743
  %745 = vrot.lane.b32.xlu0 %v740, 8
  %v746 = vpop.permute.xlu0 %745
  %747 = vrot.lane.b32.xlu0 %v741, 8
  %v748 = vpop.permute.xlu0 %747
  %749 = vrot.lane.b32.xlu0 %v742, 8
  %v750 = vpop.permute.xlu0 %749
  %v751 = vadd.f32 %v739, %v744
  %v752 = vadd.f32 %v740, %v746
  %v753 = vadd.f32 %v741, %v748
  %v754 = vadd.f32 %v742, %v750
  %755 = vrot.lane.b32.xlu0 %v751, 16
  %v756 = vpop.permute.xlu0 %755
  %757 = vrot.lane.b32.xlu0 %v752, 16
  %v758 = vpop.permute.xlu0 %757
  %759 = vrot.lane.b32.xlu0 %v753, 16
  %v760 = vpop.permute.xlu0 %759
  %761 = vrot.lane.b32.xlu0 %v754, 16
  %v762 = vpop.permute.xlu0 %761
  %v763 = vadd.f32 %v751, %v756
  %v764 = vadd.f32 %v752, %v758
  %v765 = vadd.f32 %v753, %v760
  %v766 = vadd.f32 %v754, %v762
  %767 = vrot.lane.b32.xlu0 %v763, 32
  %v768 = vpop.permute.xlu0 %767
  %769 = vrot.lane.b32.xlu0 %v764, 32
  %v770 = vpop.permute.xlu0 %769
  %771 = vrot.lane.b32.xlu0 %v765, 32
  %v772 = vpop.permute.xlu0 %771
  %773 = vrot.lane.b32.xlu0 %v766, 32
  %v774 = vpop.permute.xlu0 %773
  %v775 = vadd.f32 %v763, %v768
  %v776 = vadd.f32 %v764, %v770
  %v777 = vadd.f32 %v765, %v772
  %v778 = vadd.f32 %v766, %v774
  %779 = vrot.lane.b32.xlu0 %v775, 64
  %v780 = vpop.permute.xlu0 %779
  %781 = vrot.lane.b32.xlu0 %v776, 64
  %v782 = vpop.permute.xlu0 %781
  %783 = vrot.lane.b32.xlu0 %v777, 64
  %v784 = vpop.permute.xlu0 %783
  %785 = vrot.lane.b32.xlu0 %v778, 64
  %v786 = vpop.permute.xlu0 %785
  %v787 = vadd.f32 %v775, %v780
  %v788 = vadd.f32 %v776, %v782
  %v789 = vadd.f32 %v777, %v784
  %v790 = vadd.f32 %v778, %v786
  %v791 = vadd.f32 %v787, %v788
  %v792 = vadd.f32 %v791, %v789
  %v793 = vadd.f32 %v792, %v790
  %v794 = vrot.slane %v793, 4
  %v795 = vadd.f32 %v793, %v794
  %v796 = vrot.slane %v795, 2
  %v797 = vadd.f32 %v795, %v796
  %v798 = vrot.slane %v797, 1
  %v799 = vadd.f32 %v797, %v798
  %v800 = vmul.f32 %v799, 0.001953125
  %v801 = vadd.f32 %v800, 1e-05
  %v802 = vrsqrt.pop %v801
  %v803 = vmul.f32 %v30, %v802
  %v804 = vlaneseq
  %v805 = vshrl.u32 %v804, 7
  %v806 = vsub.s32 4, %v805
  %v807 = vrot.slane %v803, %v806
  %v808 = vmul.f32 %v735, %v807
  %v809 = vmul.f32 %v736, %v807
  %v810 = vmul.f32 %v737, %v807
  %v811 = vmul.f32 %v738, %v807
  %v812 = vlaneseq
  %v813 = vshrl.u32 %v812, 7
  %v814 = vsub.s32 5, %v813
  %v815 = vrot.slane %v30, %v814
  %v816 = vadd.f32 %v808, %v815
  %v817 = vadd.f32 %v809, %v815
  %v818 = vadd.f32 %v810, %v815
  %v819 = vadd.f32 %v811, %v815
  %v820 = vadd.f32 %v567, %v816
  %v821 = vadd.f32 %v568, %v817
  %v822 = vadd.f32 %v569, %v818
  %v823 = vadd.f32 %v570, %v819
  %v824 = vmax.f32 %v820, 0.0
  %v825 = vmax.f32 %v821, 0.0
  %v826 = vmax.f32 %v822, 0.0
  %v827 = vmax.f32 %v823, 0.0
  %s828 = scalar_lea.vmem %s4, 256
  %v829 = vld [vmem:[%s828] sm:$0xff]
  %v830 = vld [vmem:[%s828 + $0x8] sm:$0xff]
  %v831 = vld [vmem:[%s828 + $0x10] sm:$0xff]
  %v832 = vld [vmem:[%s828 + $0x18] sm:$0xff]
  %v833 = vld [vmem:[%s828 + $0x20] sm:$0xff]
  %v834 = vld [vmem:[%s828 + $0x28] sm:$0xff]
  %v835 = vld [vmem:[%s828 + $0x30] sm:$0xff]
  %v836 = vld [vmem:[%s828 + $0x38] sm:$0xff]
  %v837 = vld [vmem:[%s828 + $0x40] sm:$0xff]
  %v838 = vld [vmem:[%s828 + $0x48] sm:$0xff]
  %v839 = vld [vmem:[%s828 + $0x50] sm:$0xff]
  %v840 = vld [vmem:[%s828 + $0x58] sm:$0xff]
  %v841 = vld [vmem:[%s828 + $0x60] sm:$0xff]
  %v842 = vld [vmem:[%s828 + $0x68] sm:$0xff]
  %v843 = vld [vmem:[%s828 + $0x70] sm:$0xff]
  %v844 = vld [vmem:[%s828 + $0x78] sm:$0xff]
  %v845 = vlaneseq
  %v846 = vshrl.u32 %v845, 7
  %v847 = vsub.s32 6, %v846
  %v848 = vrot.slane %v30, %v847
  %849 = vmatprep.subr.mxu0 0.0
  %850 = vmatpush1.msra.mxu0 %v829
  %851 = vmatprep.subr.mxu0 0.0
  %852 = vmatpush1.msra.mxu0 %v830
  %853 = vmatprep.subr.mxu0 0.0
  %854 = vmatpush1.msra.mxu0 %v831
  %855 = vmatprep.subr.mxu0 0.0
  %856 = vmatpush1.msra.mxu0 %v832
  %857 = vmatprep.subr.mxu0 0.0
  %858 = vmatpush1.msra.mxu0 %v833
  %859 = vmatprep.subr.mxu0 0.0
  %860 = vmatpush1.msra.mxu0 %v834
  %861 = vmatprep.subr.mxu0 0.0
  %862 = vmatpush1.msra.mxu0 %v835
  %863 = vmatprep.subr.mxu0 0.0
  %864 = vmatpush1.msra.mxu0 %v836
  %865 = vmatprep.subr.mxu0 0.0
  %866 = vmatpush1.msra.mxu0 %v837
  %867 = vmatprep.subr.mxu0 0.0
  %868 = vmatpush1.msra.mxu0 %v838
  %869 = vmatprep.subr.mxu0 0.0
  %870 = vmatpush1.msra.mxu0 %v839
  %871 = vmatprep.subr.mxu0 0.0
  %872 = vmatpush1.msra.mxu0 %v840
  %873 = vmatprep.subr.mxu0 0.0
  %874 = vmatpush1.msra.mxu0 %v841
  %875 = vmatprep.subr.mxu0 0.0
  %876 = vmatpush1.msra.mxu0 %v842
  %877 = vmatprep.subr.mxu0 0.0
  %878 = vmatpush1.msra.mxu0 %v843
  %879 = vmatprep.subr.mxu0 0.0
  %880 = vmatpush1.msra.mxu0 %v844
  %881 = vmatprep.subr.mxu0 0.0
  %882 = vmatpush1.msra.mxu0 0.0
  %883 = vmatprep.subr.mxu0 0.0
  %884 = vmatpush1.msra.mxu0 0.0
  %885 = vmatprep.subr.mxu0 0.0
  %886 = vmatpush1.msra.mxu0 0.0
  %887 = vmatprep.subr.mxu0 0.0
  %888 = vmatpush1.msra.mxu0 0.0
  %889 = vmatprep.subr.mxu0 0.0
  %890 = vmatpush1.msra.mxu0 0.0
  %891 = vmatprep.subr.mxu0 0.0
  %892 = vmatpush1.msra.mxu0 0.0
  %893 = vmatprep.subr.mxu0 0.0
  %894 = vmatpush1.msra.mxu0 0.0
  %895 = vmatprep.subr.mxu0 0.0
  %896 = vmatpush1.msra.mxu0 0.0
  %897 = vmatprep.subr.mxu0 0.0
  %898 = vmatpush1.msra.mxu0 0.0
  %899 = vmatprep.subr.mxu0 0.0
  %900 = vmatpush1.msra.mxu0 0.0
  %901 = vmatprep.subr.mxu0 0.0
  %902 = vmatpush1.msra.mxu0 0.0
  %903 = vmatprep.subr.mxu0 0.0
  %904 = vmatpush1.msra.mxu0 0.0
  %905 = vmatprep.subr.mxu0 0.0
  %906 = vmatpush1.msra.mxu0 0.0
  %907 = vmatprep.subr.mxu0 0.0
  %908 = vmatpush1.msra.mxu0 0.0
  %909 = vmatprep.subr.mxu0 0.0
  %910 = vmatpush1.msra.mxu0 0.0
  %911 = vmatprep.subr.mxu0 0.0
  %912 = vmatpush1.msra.mxu0 0.0
  %913 = vmatprep.mubr.f32.mxu0 0.0
  %914 = vmatmul.mubr.f32.gmra.mrb[0].mxu0 %v824
  %v915 = vpop.f32.mrb[0].mxu0
  %v916 = vadd.f32 %v848, %v915
  %v917 = vpop.f32.mrb[0].mxu0
  %918 = vmatprep.mubr.f32.mxu0 0.0
  %919 = vmatmul.mubr.f32.gmra.mrb[0].mxu0 %v825
  %v920 = vpop.f32.mrb[0].mxu0
  %v921 = vadd.f32 %v848, %v920
  %v922 = vpop.f32.mrb[0].mxu0
  %923 = vmatprep.mubr.f32.mxu0 0.0
  %924 = vmatmul.mubr.f32.gmra.mrb[0].mxu0 %v826
  %v925 = vpop.f32.mrb[0].mxu0
  %v926 = vadd.f32 %v848, %v925
  %v927 = vpop.f32.mrb[0].mxu0
  %928 = vmatprep.mubr.f32.mxu0 0.0
  %929 = vmatmul.mubr.f32.gmra.mrb[0].mxu0 %v827
  %v930 = vpop.f32.mrb[0].mxu0
  %v931 = vadd.f32 %v848, %v930
  %v932 = vpop.f32.mrb[0].mxu0
  %933 = vdwg.mxu0
  %934 = vrot.lane.b32.xlu0 %v916, 8
  %v935 = vpop.permute.xlu0 %934
  %936 = vrot.lane.b32.xlu0 %v921, 8
  %v937 = vpop.permute.xlu0 %936
  %938 = vrot.lane.b32.xlu0 %v926, 8
  %v939 = vpop.permute.xlu0 %938
  %940 = vrot.lane.b32.xlu0 %v931, 8
  %v941 = vpop.permute.xlu0 %940
  %v942 = vadd.f32 %v916, %v935
  %v943 = vadd.f32 %v921, %v937
  %v944 = vadd.f32 %v926, %v939
  %v945 = vadd.f32 %v931, %v941
  %946 = vrot.lane.b32.xlu0 %v942, 16
  %v947 = vpop.permute.xlu0 %946
  %948 = vrot.lane.b32.xlu0 %v943, 16
  %v949 = vpop.permute.xlu0 %948
  %950 = vrot.lane.b32.xlu0 %v944, 16
  %v951 = vpop.permute.xlu0 %950
  %952 = vrot.lane.b32.xlu0 %v945, 16
  %v953 = vpop.permute.xlu0 %952
  %v954 = vadd.f32 %v942, %v947
  %v955 = vadd.f32 %v943, %v949
  %v956 = vadd.f32 %v944, %v951
  %v957 = vadd.f32 %v945, %v953
  %958 = vrot.lane.b32.xlu0 %v954, 32
  %v959 = vpop.permute.xlu0 %958
  %960 = vrot.lane.b32.xlu0 %v955, 32
  %v961 = vpop.permute.xlu0 %960
  %962 = vrot.lane.b32.xlu0 %v956, 32
  %v963 = vpop.permute.xlu0 %962
  %964 = vrot.lane.b32.xlu0 %v957, 32
  %v965 = vpop.permute.xlu0 %964
  %v966 = vadd.f32 %v954, %v959
  %v967 = vadd.f32 %v955, %v961
  %v968 = vadd.f32 %v956, %v963
  %v969 = vadd.f32 %v957, %v965
  %970 = vrot.lane.b32.xlu0 %v966, 64
  %v971 = vpop.permute.xlu0 %970
  %972 = vrot.lane.b32.xlu0 %v967, 64
  %v973 = vpop.permute.xlu0 %972
  %974 = vrot.lane.b32.xlu0 %v968, 64
  %v975 = vpop.permute.xlu0 %974
  %976 = vrot.lane.b32.xlu0 %v969, 64
  %v977 = vpop.permute.xlu0 %976
  %v978 = vadd.f32 %v966, %v971
  %v979 = vadd.f32 %v967, %v973
  %v980 = vadd.f32 %v968, %v975
  %v981 = vadd.f32 %v969, %v977
  %v982 = vadd.f32 %v978, %v979
  %v983 = vadd.f32 %v982, %v980
  %v984 = vadd.f32 %v983, %v981
  %v985 = vrot.slane %v984, 4
  %v986 = vadd.f32 %v984, %v985
  %v987 = vrot.slane %v986, 2
  %v988 = vadd.f32 %v986, %v987
  %v989 = vrot.slane %v988, 1
  %v990 = vadd.f32 %v988, %v989
  %v991 = vmul.f32 %v990, 0.001953125
  %v992 = vsub.f32 %v916, %v991
  %v993 = vsub.f32 %v921, %v991
  %v994 = vsub.f32 %v926, %v991
  %v995 = vsub.f32 %v931, %v991
  %v996 = vmul.f32 %v992, %v992
  %v997 = vmul.f32 %v993, %v993
  %v998 = vmul.f32 %v994, %v994
  %v999 = vmul.f32 %v995, %v995
  %1000 = vrot.lane.b32.xlu0 %v996, 8
  %v1001 = vpop.permute.xlu0 %1000
  %1002 = vrot.lane.b32.xlu0 %v997, 8
  %v1003 = vpop.permute.xlu0 %1002
  %1004 = vrot.lane.b32.xlu0 %v998, 8
  %v1005 = vpop.permute.xlu0 %1004
  %1006 = vrot.lane.b32.xlu0 %v999, 8
  %v1007 = vpop.permute.xlu0 %1006
  %v1008 = vadd.f32 %v996, %v1001
  %v1009 = vadd.f32 %v997, %v1003
  %v1010 = vadd.f32 %v998, %v1005
  %v1011 = vadd.f32 %v999, %v1007
  %1012 = vrot.lane.b32.xlu0 %v1008, 16
  %v1013 = vpop.permute.xlu0 %1012
  %1014 = vrot.lane.b32.xlu0 %v1009, 16
  %v1015 = vpop.permute.xlu0 %1014
  %1016 = vrot.lane.b32.xlu0 %v1010, 16
  %v1017 = vpop.permute.xlu0 %1016
  %1018 = vrot.lane.b32.xlu0 %v1011, 16
  %v1019 = vpop.permute.xlu0 %1018
  %v1020 = vadd.f32 %v1008, %v1013
  %v1021 = vadd.f32 %v1009, %v1015
  %v1022 = vadd.f32 %v1010, %v1017
  %v1023 = vadd.f32 %v1011, %v1019
  %1024 = vrot.lane.b32.xlu0 %v1020, 32
  %v1025 = vpop.permute.xlu0 %1024
  %1026 = vrot.lane.b32.xlu0 %v1021, 32
  %v1027 = vpop.permute.xlu0 %1026
  %1028 = vrot.lane.b32.xlu0 %v1022, 32
  %v1029 = vpop.permute.xlu0 %1028
  %1030 = vrot.lane.b32.xlu0 %v1023, 32
  %v1031 = vpop.permute.xlu0 %1030
  %v1032 = vadd.f32 %v1020, %v1025
  %v1033 = vadd.f32 %v1021, %v1027
  %v1034 = vadd.f32 %v1022, %v1029
  %v1035 = vadd.f32 %v1023, %v1031
  %1036 = vrot.lane.b32.xlu0 %v1032, 64
  %v1037 = vpop.permute.xlu0 %1036
  %1038 = vrot.lane.b32.xlu0 %v1033, 64
  %v1039 = vpop.permute.xlu0 %1038
  %1040 = vrot.lane.b32.xlu0 %v1034, 64
  %v1041 = vpop.permute.xlu0 %1040
  %1042 = vrot.lane.b32.xlu0 %v1035, 64
  %v1043 = vpop.permute.xlu0 %1042
  %v1044 = vadd.f32 %v1032, %v1037
  %v1045 = vadd.f32 %v1033, %v1039
  %v1046 = vadd.f32 %v1034, %v1041
  %v1047 = vadd.f32 %v1035, %v1043
  %v1048 = vadd.f32 %v1044, %v1045
  %v1049 = vadd.f32 %v1048, %v1046
  %v1050 = vadd.f32 %v1049, %v1047
  %v1051 = vrot.slane %v1050, 4
  %v1052 = vadd.f32 %v1050, %v1051
  %v1053 = vrot.slane %v1052, 2
  %v1054 = vadd.f32 %v1052, %v1053
  %v1055 = vrot.slane %v1054, 1
  %v1056 = vadd.f32 %v1054, %v1055
  %v1057 = vmul.f32 %v1056, 0.001953125
  %v1058 = vadd.f32 %v1057, 1e-05
  %v1059 = vrsqrt.pop %v1058
  %v1060 = vmul.f32 %v30, %v1059
  %v1061 = vlaneseq
  %v1062 = vshrl.u32 %v1061, 7
  %v1063 = vsub.s32 7, %v1062
  %v1064 = vrot.slane %v1060, %v1063
  %v1065 = vmul.f32 %v992, %v1064
  %v1066 = vmul.f32 %v993, %v1064
  %v1067 = vmul.f32 %v994, %v1064
  %v1068 = vmul.f32 %v995, %v1064
  %v1069 = vlaneseq
  %v1070 = vshrl.u32 %v1069, 7
  %v1071 = vsub.s32 0, %v1070
  %v1072 = vrot.slane %v31, %v1071
  %v1073 = vadd.f32 %v1065, %v1072
  %v1074 = vadd.f32 %v1066, %v1072
  %v1075 = vadd.f32 %v1067, %v1072
  %v1076 = vadd.f32 %v1068, %v1072
  %v1077 = vsub.f32 0.0, %v1073
  %v1078 = vsub.f32 0.0, %v1074
  %v1079 = vsub.f32 0.0, %v1075
  %v1080 = vsub.f32 0.0, %v1076
  %v1081 = vmul.f32 %v1077, 1.442695
  %v1082 = vpow.pop %v1081
  %v1083 = vmul.f32 %v1078, 1.442695
  %v1084 = vpow.pop %v1083
  %v1085 = vmul.f32 %v1079, 1.442695
  %v1086 = vpow.pop %v1085
  %v1087 = vmul.f32 %v1080, 1.442695
  %v1088 = vpow.pop %v1087
  %v1089 = vadd.f32 %v1082, 1.0
  %v1090 = vadd.f32 %v1084, 1.0
  %v1091 = vadd.f32 %v1086, 1.0
  %v1092 = vadd.f32 %v1088, 1.0
  %v1093 = vrcp.pop %v1089
  %v1094 = vmul.f32 1.0, %v1093
  %v1095 = vrcp.pop %v1090
  %v1096 = vmul.f32 1.0, %v1095
  %v1097 = vrcp.pop %v1091
  %v1098 = vmul.f32 1.0, %v1097
  %v1099 = vrcp.pop %v1092
  %v1100 = vmul.f32 1.0, %v1099
  %v1101 = vmul.f32 %v319, %v1094
  %v1102 = vmul.f32 %v320, %v1096
  %v1103 = vmul.f32 %v321, %v1098
  %v1104 = vmul.f32 %v322, %v1100
  %v1105 = vrot.slane %v301, 7
  %v1106 = vrot.slane %v1101, 7
  %v1107 = vrot.slane %v306, 7
  %v1108 = vrot.slane %v1102, 7
  %v1109 = vrot.slane %v311, 7
  %v1110 = vrot.slane %v1103, 7
  %v1111 = vrot.slane %v316, 7
  %v1112 = vrot.slane %v1104, 7
  %vm1113 = vcmp.lt.s32.totalorder %v33, 1
  %v1114 = vsel %vm1113, %v1109, %v1111
  %v1115 = vsel %vm1113, %v1110, %v1112
  %v1116 = vsel %vm1113, %v1107, %v1109
  %v1117 = vsel %vm1113, %v1108, %v1110
  %v1118 = vsel %vm1113, %v1105, %v1107
  %v1119 = vsel %vm1113, %v1106, %v1108
  %v1120 = vsel %vm1113, %v1111, %v1105
  %v1121 = vsel %vm1113, %v1112, %v1106
  %v1122 = vmul.f32 %v1120, %v93
  %v1123 = vmul.f32 %v1121, %v93
  %v1124 = vmul.f32 %v1118, %v94
  %v1125 = vmul.f32 %v1119, %v94
  %v1126 = vmul.f32 %v1116, %v95
  %v1127 = vmul.f32 %v1117, %v95
  %v1128 = vmul.f32 %v1114, %v96
  %v1129 = vmul.f32 %v1115, %v96
  %v1130 = vrot.slane %v301, 1
  %v1131 = vrot.slane %v1101, 1
  %v1132 = vrot.slane %v306, 1
  %v1133 = vrot.slane %v1102, 1
  %v1134 = vrot.slane %v311, 1
  %v1135 = vrot.slane %v1103, 1
  %v1136 = vrot.slane %v316, 1
  %v1137 = vrot.slane %v1104, 1
  %vm1138 = vcmp.lt.s32.totalorder %v33, 7
  %v1139 = vsel %vm1138, %v1134, %v1136
  %v1140 = vsel %vm1138, %v1135, %v1137
  %v1141 = vsel %vm1138, %v1132, %v1134
  %v1142 = vsel %vm1138, %v1133, %v1135
  %v1143 = vsel %vm1138, %v1130, %v1132
  %v1144 = vsel %vm1138, %v1131, %v1133
  %v1145 = vsel %vm1138, %v1136, %v1130
  %v1146 = vsel %vm1138, %v1137, %v1131
  %v1147 = vmul.f32 %v1143, %v105
  %v1148 = vmul.f32 %v1144, %v105
  %v1149 = vmul.f32 %v1141, %v106
  %v1150 = vmul.f32 %v1142, %v106
  %v1151 = vmul.f32 %v1139, %v107
  %v1152 = vmul.f32 %v1140, %v107
  %v1153 = vmul.f32 %v1145, %v108
  %v1154 = vmul.f32 %v1146, %v108
  %v1155 = vld [vmem:[%s5] sm:$0xf]
  %v1156 = vld [vmem:[%s5 + $0x4] sm:$0xf]
  %v1157 = vld [vmem:[%s5 + $0x8] sm:$0xf]
  %v1158 = vld [vmem:[%s5 + $0xc] sm:$0xf]
  %v1159 = vld [vmem:[%s5 + $0x10] sm:$0xf]
  %v1160 = vld [vmem:[%s5 + $0x14] sm:$0xf]
  %v1161 = vld [vmem:[%s5 + $0x18] sm:$0xf]
  %v1162 = vld [vmem:[%s5 + $0x1c] sm:$0xf]
  %v1163 = vld [vmem:[%s5 + $0x20] sm:$0xf]
  %v1164 = vld [vmem:[%s5 + $0x24] sm:$0xf]
  %v1165 = vld [vmem:[%s5 + $0x28] sm:$0xf]
  %v1166 = vld [vmem:[%s5 + $0x2c] sm:$0xf]
  %v1167 = vld [vmem:[%s5 + $0x30] sm:$0xf]
  %v1168 = vld [vmem:[%s5 + $0x34] sm:$0xf]
  %v1169 = vld [vmem:[%s5 + $0x38] sm:$0xf]
  %v1170 = vld [vmem:[%s5 + $0x3c] sm:$0xf]
  %v1171 = vld [vmem:[%s5 + $0x40] sm:$0xf]
  %v1172 = vld [vmem:[%s5 + $0x44] sm:$0xf]
  %v1173 = vld [vmem:[%s5 + $0x48] sm:$0xf]
  %v1174 = vld [vmem:[%s5 + $0x4c] sm:$0xf]
  %v1175 = vld [vmem:[%s5 + $0x50] sm:$0xf]
  %v1176 = vld [vmem:[%s5 + $0x54] sm:$0xf]
  %v1177 = vld [vmem:[%s5 + $0x58] sm:$0xf]
  %v1178 = vld [vmem:[%s5 + $0x5c] sm:$0xf]
  %v1179 = vld [vmem:[%s5 + $0x60] sm:$0xf]
  %v1180 = vld [vmem:[%s5 + $0x64] sm:$0xf]
  %v1181 = vld [vmem:[%s5 + $0x68] sm:$0xf]
  %v1182 = vld [vmem:[%s5 + $0x6c] sm:$0xf]
  %v1183 = vld [vmem:[%s5 + $0x70] sm:$0xf]
  %v1184 = vld [vmem:[%s5 + $0x74] sm:$0xf]
  %v1185 = vld [vmem:[%s5 + $0x78] sm:$0xf]
  %v1186 = vld [vmem:[%s5 + $0x7c] sm:$0xf]
  %v1187 = vpack.c.bf16 %v1124, %v1122
  %v1188 = vpack.c.bf16 %v1125, %v1123
  %v1189 = vpack.c.bf16 %v1128, %v1126
  %v1190 = vpack.c.bf16 %v1129, %v1127
  %s1191 = scalar_lea.vmem %s5, 128
  %v1192 = vld [vmem:[%s1191] sm:$0xf]
  %v1193 = vld [vmem:[%s1191 + $0x4] sm:$0xf]
  %v1194 = vld [vmem:[%s1191 + $0x8] sm:$0xf]
  %v1195 = vld [vmem:[%s1191 + $0xc] sm:$0xf]
  %v1196 = vld [vmem:[%s1191 + $0x10] sm:$0xf]
  %v1197 = vld [vmem:[%s1191 + $0x14] sm:$0xf]
  %v1198 = vld [vmem:[%s1191 + $0x18] sm:$0xf]
  %v1199 = vld [vmem:[%s1191 + $0x1c] sm:$0xf]
  %v1200 = vld [vmem:[%s1191 + $0x20] sm:$0xf]
  %v1201 = vld [vmem:[%s1191 + $0x24] sm:$0xf]
  %v1202 = vld [vmem:[%s1191 + $0x28] sm:$0xf]
  %v1203 = vld [vmem:[%s1191 + $0x2c] sm:$0xf]
  %v1204 = vld [vmem:[%s1191 + $0x30] sm:$0xf]
  %v1205 = vld [vmem:[%s1191 + $0x34] sm:$0xf]
  %v1206 = vld [vmem:[%s1191 + $0x38] sm:$0xf]
  %v1207 = vld [vmem:[%s1191 + $0x3c] sm:$0xf]
  %v1208 = vld [vmem:[%s1191 + $0x40] sm:$0xf]
  %v1209 = vld [vmem:[%s1191 + $0x44] sm:$0xf]
  %v1210 = vld [vmem:[%s1191 + $0x48] sm:$0xf]
  %v1211 = vld [vmem:[%s1191 + $0x4c] sm:$0xf]
  %v1212 = vld [vmem:[%s1191 + $0x50] sm:$0xf]
  %v1213 = vld [vmem:[%s1191 + $0x54] sm:$0xf]
  %v1214 = vld [vmem:[%s1191 + $0x58] sm:$0xf]
  %v1215 = vld [vmem:[%s1191 + $0x5c] sm:$0xf]
  %v1216 = vld [vmem:[%s1191 + $0x60] sm:$0xf]
  %v1217 = vld [vmem:[%s1191 + $0x64] sm:$0xf]
  %v1218 = vld [vmem:[%s1191 + $0x68] sm:$0xf]
  %v1219 = vld [vmem:[%s1191 + $0x6c] sm:$0xf]
  %v1220 = vld [vmem:[%s1191 + $0x70] sm:$0xf]
  %v1221 = vld [vmem:[%s1191 + $0x74] sm:$0xf]
  %v1222 = vld [vmem:[%s1191 + $0x78] sm:$0xf]
  %v1223 = vld [vmem:[%s1191 + $0x7c] sm:$0xf]
  %v1224 = vpack.c.bf16 %v306, %v301
  %v1225 = vpack.c.bf16 %v1102, %v1101
  %v1226 = vpack.c.bf16 %v316, %v311
  %v1227 = vpack.c.bf16 %v1104, %v1103
  %v1260 = vunpack.c.l.b16 %v1192
  %v1261 = vunpack.c.l.b16 %v1193
  %v1262 = vunpack.c.l.b16 %v1194
  %v1263 = vunpack.c.l.b16 %v1195
  %v1264 = vunpack.c.l.b16 %v1196
  %v1265 = vunpack.c.l.b16 %v1197
  %v1266 = vunpack.c.l.b16 %v1198
  %v1267 = vunpack.c.l.b16 %v1199
  %v1268 = vunpack.c.l.b16 %v1200
  %v1269 = vunpack.c.l.b16 %v1201
  %v1270 = vunpack.c.l.b16 %v1202
  %v1271 = vunpack.c.l.b16 %v1203
  %v1272 = vunpack.c.l.b16 %v1204
  %v1273 = vunpack.c.l.b16 %v1205
  %v1274 = vunpack.c.l.b16 %v1206
  %v1275 = vunpack.c.l.b16 %v1207
  %v1276 = vunpack.c.l.b16 %v1208
  %v1277 = vunpack.c.l.b16 %v1209
  %v1278 = vunpack.c.l.b16 %v1210
  %v1279 = vunpack.c.l.b16 %v1211
  %v1280 = vunpack.c.l.b16 %v1212
  %v1281 = vunpack.c.l.b16 %v1213
  %v1282 = vunpack.c.l.b16 %v1214
  %v1283 = vunpack.c.l.b16 %v1215
  %v1284 = vunpack.c.l.b16 %v1216
  %v1285 = vunpack.c.l.b16 %v1217
  %v1286 = vunpack.c.l.b16 %v1218
  %v1287 = vunpack.c.l.b16 %v1219
  %v1288 = vunpack.c.l.b16 %v1220
  %v1289 = vunpack.c.l.b16 %v1221
  %v1290 = vunpack.c.l.b16 %v1222
  %v1291 = vunpack.c.l.b16 %v1223
  %v1292 = vpack.c.b16 %v1261, %v1260
  %v1293 = vpack.c.b16 %v1263, %v1262
  %v1294 = vpack.c.b16 %v1265, %v1264
  %v1295 = vpack.c.b16 %v1267, %v1266
  %v1296 = vpack.c.b16 %v1269, %v1268
  %v1297 = vpack.c.b16 %v1271, %v1270
  %v1298 = vpack.c.b16 %v1273, %v1272
  %v1299 = vpack.c.b16 %v1275, %v1274
  %v1300 = vpack.c.b16 %v1277, %v1276
  %v1301 = vpack.c.b16 %v1279, %v1278
  %v1302 = vpack.c.b16 %v1281, %v1280
  %v1303 = vpack.c.b16 %v1283, %v1282
  %v1304 = vpack.c.b16 %v1285, %v1284
  %v1305 = vpack.c.b16 %v1287, %v1286
  %v1306 = vpack.c.b16 %v1289, %v1288
  %v1307 = vpack.c.b16 %v1291, %v1290
  %1324 = vmatprep.subr.bf16.mxu0 0
  %1325 = vmatpush1.bf16.msra.mxu0 %v1292
  %1326 = vmatprep.subr.bf16.mxu0 0
  %1327 = vmatpush1.bf16.msra.mxu0 %v1293
  %1328 = vmatprep.subr.bf16.mxu0 0
  %1329 = vmatpush1.bf16.msra.mxu0 %v1294
  %1330 = vmatprep.subr.bf16.mxu0 0
  %1331 = vmatpush1.bf16.msra.mxu0 %v1295
  %1332 = vmatprep.subr.bf16.mxu0 0
  %1333 = vmatpush1.bf16.msra.mxu0 %v1296
  %1334 = vmatprep.subr.bf16.mxu0 0
  %1335 = vmatpush1.bf16.msra.mxu0 %v1297
  %1336 = vmatprep.subr.bf16.mxu0 0
  %1337 = vmatpush1.bf16.msra.mxu0 %v1298
  %1338 = vmatprep.subr.bf16.mxu0 0
  %1339 = vmatpush1.bf16.msra.mxu0 %v1299
  %1340 = vmatprep.subr.bf16.mxu0 0
  %1341 = vmatpush1.bf16.msra.mxu0 %v1300
  %1342 = vmatprep.subr.bf16.mxu0 0
  %1343 = vmatpush1.bf16.msra.mxu0 %v1301
  %1344 = vmatprep.subr.bf16.mxu0 0
  %1345 = vmatpush1.bf16.msra.mxu0 %v1302
  %1346 = vmatprep.subr.bf16.mxu0 0
  %1347 = vmatpush1.bf16.msra.mxu0 %v1303
  %1348 = vmatprep.subr.bf16.mxu0 0
  %1349 = vmatpush1.bf16.msra.mxu0 %v1304
  %1350 = vmatprep.subr.bf16.mxu0 0
  %1351 = vmatpush1.bf16.msra.mxu0 %v1305
  %1352 = vmatprep.subr.bf16.mxu0 0
  %1353 = vmatpush1.bf16.msra.mxu0 %v1306
  %1354 = vmatprep.subr.bf16.mxu0 0
  %1355 = vmatpush1.bf16.msra.mxu0 %v1307
  %1356 = vmatprep.mubr.bf16.mxu0 %v1225
  %1357 = vmatmul.mubr.bf16.gmra.mrb[0].mxu0 %v1224
  %v1358 = vpop.f32.mrb[0].mxu0
  %v1359 = vadd.f32 0.0, %v1358
  %v1360 = vpop.f32.mrb[0].mxu0
  %v1361 = vpop.f32.mrb[0].mxu0
  %v1362 = vadd.f32 0.0, %v1361
  %v1363 = vpop.f32.mrb[0].mxu0
  %1364 = vmatprep.mubr.bf16.mxu0 %v1227
  %1365 = vmatmul.mubr.bf16.gmra.mrb[0].mxu0 %v1226
  %v1366 = vpop.f32.mrb[0].mxu0
  %v1367 = vadd.f32 0.0, %v1366
  %v1368 = vpop.f32.mrb[0].mxu0
  %v1369 = vpop.f32.mrb[0].mxu0
  %v1370 = vadd.f32 0.0, %v1369
  %v1371 = vpop.f32.mrb[0].mxu0
  %1372 = vdwg.mxu0
  %v1405 = vunpack.c.l.b16 %v1155
  %v1406 = vunpack.c.l.b16 %v1156
  %v1407 = vunpack.c.l.b16 %v1157
  %v1408 = vunpack.c.l.b16 %v1158
  %v1409 = vunpack.c.l.b16 %v1159
  %v1410 = vunpack.c.l.b16 %v1160
  %v1411 = vunpack.c.l.b16 %v1161
  %v1412 = vunpack.c.l.b16 %v1162
  %v1413 = vunpack.c.l.b16 %v1163
  %v1414 = vunpack.c.l.b16 %v1164
  %v1415 = vunpack.c.l.b16 %v1165
  %v1416 = vunpack.c.l.b16 %v1166
  %v1417 = vunpack.c.l.b16 %v1167
  %v1418 = vunpack.c.l.b16 %v1168
  %v1419 = vunpack.c.l.b16 %v1169
  %v1420 = vunpack.c.l.b16 %v1170
  %v1421 = vunpack.c.l.b16 %v1171
  %v1422 = vunpack.c.l.b16 %v1172
  %v1423 = vunpack.c.l.b16 %v1173
  %v1424 = vunpack.c.l.b16 %v1174
  %v1425 = vunpack.c.l.b16 %v1175
  %v1426 = vunpack.c.l.b16 %v1176
  %v1427 = vunpack.c.l.b16 %v1177
  %v1428 = vunpack.c.l.b16 %v1178
  %v1429 = vunpack.c.l.b16 %v1179
  %v1430 = vunpack.c.l.b16 %v1180
  %v1431 = vunpack.c.l.b16 %v1181
  %v1432 = vunpack.c.l.b16 %v1182
  %v1433 = vunpack.c.l.b16 %v1183
  %v1434 = vunpack.c.l.b16 %v1184
  %v1435 = vunpack.c.l.b16 %v1185
  %v1436 = vunpack.c.l.b16 %v1186
  %v1437 = vpack.c.b16 %v1406, %v1405
  %v1438 = vpack.c.b16 %v1408, %v1407
  %v1439 = vpack.c.b16 %v1410, %v1409
  %v1440 = vpack.c.b16 %v1412, %v1411
  %v1441 = vpack.c.b16 %v1414, %v1413
  %v1442 = vpack.c.b16 %v1416, %v1415
  %v1443 = vpack.c.b16 %v1418, %v1417
  %v1444 = vpack.c.b16 %v1420, %v1419
  %v1445 = vpack.c.b16 %v1422, %v1421
  %v1446 = vpack.c.b16 %v1424, %v1423
  %v1447 = vpack.c.b16 %v1426, %v1425
  %v1448 = vpack.c.b16 %v1428, %v1427
  %v1449 = vpack.c.b16 %v1430, %v1429
  %v1450 = vpack.c.b16 %v1432, %v1431
  %v1451 = vpack.c.b16 %v1434, %v1433
  %v1452 = vpack.c.b16 %v1436, %v1435
  %1469 = vmatprep.subr.bf16.mxu0 0
  %1470 = vmatpush1.bf16.msra.mxu0 %v1437
  %1471 = vmatprep.subr.bf16.mxu0 0
  %1472 = vmatpush1.bf16.msra.mxu0 %v1438
  %1473 = vmatprep.subr.bf16.mxu0 0
  %1474 = vmatpush1.bf16.msra.mxu0 %v1439
  %1475 = vmatprep.subr.bf16.mxu0 0
  %1476 = vmatpush1.bf16.msra.mxu0 %v1440
  %1477 = vmatprep.subr.bf16.mxu0 0
  %1478 = vmatpush1.bf16.msra.mxu0 %v1441
  %1479 = vmatprep.subr.bf16.mxu0 0
  %1480 = vmatpush1.bf16.msra.mxu0 %v1442
  %1481 = vmatprep.subr.bf16.mxu0 0
  %1482 = vmatpush1.bf16.msra.mxu0 %v1443
  %1483 = vmatprep.subr.bf16.mxu0 0
  %1484 = vmatpush1.bf16.msra.mxu0 %v1444
  %1485 = vmatprep.subr.bf16.mxu0 0
  %1486 = vmatpush1.bf16.msra.mxu0 %v1445
  %1487 = vmatprep.subr.bf16.mxu0 0
  %1488 = vmatpush1.bf16.msra.mxu0 %v1446
  %1489 = vmatprep.subr.bf16.mxu0 0
  %1490 = vmatpush1.bf16.msra.mxu0 %v1447
  %1491 = vmatprep.subr.bf16.mxu0 0
  %1492 = vmatpush1.bf16.msra.mxu0 %v1448
  %1493 = vmatprep.subr.bf16.mxu0 0
  %1494 = vmatpush1.bf16.msra.mxu0 %v1449
  %1495 = vmatprep.subr.bf16.mxu0 0
  %1496 = vmatpush1.bf16.msra.mxu0 %v1450
  %1497 = vmatprep.subr.bf16.mxu0 0
  %1498 = vmatpush1.bf16.msra.mxu0 %v1451
  %1499 = vmatprep.subr.bf16.mxu0 0
  %1500 = vmatpush1.bf16.msra.mxu0 %v1452
  %1501 = vmatprep.mubr.bf16.mxu0 %v1188
  %1502 = vmatmul.mubr.bf16.gmra.mrb[0].mxu0 %v1187
  %v1503 = vpop.f32.mrb[0].mxu0
  %v1504 = vadd.f32 %v1359, %v1503
  %v1505 = vpop.f32.mrb[0].mxu0
  %v1506 = vpop.f32.mrb[0].mxu0
  %v1507 = vadd.f32 %v1362, %v1506
  %v1508 = vpop.f32.mrb[0].mxu0
  %1509 = vmatprep.mubr.bf16.mxu0 %v1190
  %1510 = vmatmul.mubr.bf16.gmra.mrb[0].mxu0 %v1189
  %v1511 = vpop.f32.mrb[0].mxu0
  %v1512 = vadd.f32 %v1367, %v1511
  %v1513 = vpop.f32.mrb[0].mxu0
  %v1514 = vpop.f32.mrb[0].mxu0
  %v1515 = vadd.f32 %v1370, %v1514
  %v1516 = vpop.f32.mrb[0].mxu0
  %1517 = vdwg.mxu0
  %s1518 = scalar_lea.vmem %s5, 256
  %v1519 = vld [vmem:[%s1518] sm:$0xf]
  %v1520 = vld [vmem:[%s1518 + $0x4] sm:$0xf]
  %v1521 = vld [vmem:[%s1518 + $0x8] sm:$0xf]
  %v1522 = vld [vmem:[%s1518 + $0xc] sm:$0xf]
  %v1523 = vld [vmem:[%s1518 + $0x10] sm:$0xf]
  %v1524 = vld [vmem:[%s1518 + $0x14] sm:$0xf]
  %v1525 = vld [vmem:[%s1518 + $0x18] sm:$0xf]
  %v1526 = vld [vmem:[%s1518 + $0x1c] sm:$0xf]
  %v1527 = vld [vmem:[%s1518 + $0x20] sm:$0xf]
  %v1528 = vld [vmem:[%s1518 + $0x24] sm:$0xf]
  %v1529 = vld [vmem:[%s1518 + $0x28] sm:$0xf]
  %v1530 = vld [vmem:[%s1518 + $0x2c] sm:$0xf]
  %v1531 = vld [vmem:[%s1518 + $0x30] sm:$0xf]
  %v1532 = vld [vmem:[%s1518 + $0x34] sm:$0xf]
  %v1533 = vld [vmem:[%s1518 + $0x38] sm:$0xf]
  %v1534 = vld [vmem:[%s1518 + $0x3c] sm:$0xf]
  %v1535 = vld [vmem:[%s1518 + $0x40] sm:$0xf]
  %v1536 = vld [vmem:[%s1518 + $0x44] sm:$0xf]
  %v1537 = vld [vmem:[%s1518 + $0x48] sm:$0xf]
  %v1538 = vld [vmem:[%s1518 + $0x4c] sm:$0xf]
  %v1539 = vld [vmem:[%s1518 + $0x50] sm:$0xf]
  %v1540 = vld [vmem:[%s1518 + $0x54] sm:$0xf]
  %v1541 = vld [vmem:[%s1518 + $0x58] sm:$0xf]
  %v1542 = vld [vmem:[%s1518 + $0x5c] sm:$0xf]
  %v1543 = vld [vmem:[%s1518 + $0x60] sm:$0xf]
  %v1544 = vld [vmem:[%s1518 + $0x64] sm:$0xf]
  %v1545 = vld [vmem:[%s1518 + $0x68] sm:$0xf]
  %v1546 = vld [vmem:[%s1518 + $0x6c] sm:$0xf]
  %v1547 = vld [vmem:[%s1518 + $0x70] sm:$0xf]
  %v1548 = vld [vmem:[%s1518 + $0x74] sm:$0xf]
  %v1549 = vld [vmem:[%s1518 + $0x78] sm:$0xf]
  %v1550 = vld [vmem:[%s1518 + $0x7c] sm:$0xf]
  %v1551 = vpack.c.bf16 %v1149, %v1147
  %v1552 = vpack.c.bf16 %v1150, %v1148
  %v1553 = vpack.c.bf16 %v1153, %v1151
  %v1554 = vpack.c.bf16 %v1154, %v1152
  %v1587 = vunpack.c.l.b16 %v1519
  %v1588 = vunpack.c.l.b16 %v1520
  %v1589 = vunpack.c.l.b16 %v1521
  %v1590 = vunpack.c.l.b16 %v1522
  %v1591 = vunpack.c.l.b16 %v1523
  %v1592 = vunpack.c.l.b16 %v1524
  %v1593 = vunpack.c.l.b16 %v1525
  %v1594 = vunpack.c.l.b16 %v1526
  %v1595 = vunpack.c.l.b16 %v1527
  %v1596 = vunpack.c.l.b16 %v1528
  %v1597 = vunpack.c.l.b16 %v1529
  %v1598 = vunpack.c.l.b16 %v1530
  %v1599 = vunpack.c.l.b16 %v1531
  %v1600 = vunpack.c.l.b16 %v1532
  %v1601 = vunpack.c.l.b16 %v1533
  %v1602 = vunpack.c.l.b16 %v1534
  %v1603 = vunpack.c.l.b16 %v1535
  %v1604 = vunpack.c.l.b16 %v1536
  %v1605 = vunpack.c.l.b16 %v1537
  %v1606 = vunpack.c.l.b16 %v1538
  %v1607 = vunpack.c.l.b16 %v1539
  %v1608 = vunpack.c.l.b16 %v1540
  %v1609 = vunpack.c.l.b16 %v1541
  %v1610 = vunpack.c.l.b16 %v1542
  %v1611 = vunpack.c.l.b16 %v1543
  %v1612 = vunpack.c.l.b16 %v1544
  %v1613 = vunpack.c.l.b16 %v1545
  %v1614 = vunpack.c.l.b16 %v1546
  %v1615 = vunpack.c.l.b16 %v1547
  %v1616 = vunpack.c.l.b16 %v1548
  %v1617 = vunpack.c.l.b16 %v1549
  %v1618 = vunpack.c.l.b16 %v1550
  %v1619 = vpack.c.b16 %v1588, %v1587
  %v1620 = vpack.c.b16 %v1590, %v1589
  %v1621 = vpack.c.b16 %v1592, %v1591
  %v1622 = vpack.c.b16 %v1594, %v1593
  %v1623 = vpack.c.b16 %v1596, %v1595
  %v1624 = vpack.c.b16 %v1598, %v1597
  %v1625 = vpack.c.b16 %v1600, %v1599
  %v1626 = vpack.c.b16 %v1602, %v1601
  %v1627 = vpack.c.b16 %v1604, %v1603
  %v1628 = vpack.c.b16 %v1606, %v1605
  %v1629 = vpack.c.b16 %v1608, %v1607
  %v1630 = vpack.c.b16 %v1610, %v1609
  %v1631 = vpack.c.b16 %v1612, %v1611
  %v1632 = vpack.c.b16 %v1614, %v1613
  %v1633 = vpack.c.b16 %v1616, %v1615
  %v1634 = vpack.c.b16 %v1618, %v1617
  %1651 = vmatprep.subr.bf16.mxu0 0
  %1652 = vmatpush1.bf16.msra.mxu0 %v1619
  %1653 = vmatprep.subr.bf16.mxu0 0
  %1654 = vmatpush1.bf16.msra.mxu0 %v1620
  %1655 = vmatprep.subr.bf16.mxu0 0
  %1656 = vmatpush1.bf16.msra.mxu0 %v1621
  %1657 = vmatprep.subr.bf16.mxu0 0
  %1658 = vmatpush1.bf16.msra.mxu0 %v1622
  %1659 = vmatprep.subr.bf16.mxu0 0
  %1660 = vmatpush1.bf16.msra.mxu0 %v1623
  %1661 = vmatprep.subr.bf16.mxu0 0
  %1662 = vmatpush1.bf16.msra.mxu0 %v1624
  %1663 = vmatprep.subr.bf16.mxu0 0
  %1664 = vmatpush1.bf16.msra.mxu0 %v1625
  %1665 = vmatprep.subr.bf16.mxu0 0
  %1666 = vmatpush1.bf16.msra.mxu0 %v1626
  %1667 = vmatprep.subr.bf16.mxu0 0
  %1668 = vmatpush1.bf16.msra.mxu0 %v1627
  %1669 = vmatprep.subr.bf16.mxu0 0
  %1670 = vmatpush1.bf16.msra.mxu0 %v1628
  %1671 = vmatprep.subr.bf16.mxu0 0
  %1672 = vmatpush1.bf16.msra.mxu0 %v1629
  %1673 = vmatprep.subr.bf16.mxu0 0
  %1674 = vmatpush1.bf16.msra.mxu0 %v1630
  %1675 = vmatprep.subr.bf16.mxu0 0
  %1676 = vmatpush1.bf16.msra.mxu0 %v1631
  %1677 = vmatprep.subr.bf16.mxu0 0
  %1678 = vmatpush1.bf16.msra.mxu0 %v1632
  %1679 = vmatprep.subr.bf16.mxu0 0
  %1680 = vmatpush1.bf16.msra.mxu0 %v1633
  %1681 = vmatprep.subr.bf16.mxu0 0
  %1682 = vmatpush1.bf16.msra.mxu0 %v1634
  %1683 = vmatprep.mubr.bf16.mxu0 %v1552
  %1684 = vmatmul.mubr.bf16.gmra.mrb[0].mxu0 %v1551
  %v1685 = vpop.f32.mrb[0].mxu0
  %v1686 = vadd.f32 0.0, %v1685
  %v1687 = vpop.f32.mrb[0].mxu0
  %v1688 = vpop.f32.mrb[0].mxu0
  %v1689 = vadd.f32 0.0, %v1688
  %v1690 = vpop.f32.mrb[0].mxu0
  %1691 = vmatprep.mubr.bf16.mxu0 %v1554
  %1692 = vmatmul.mubr.bf16.gmra.mrb[0].mxu0 %v1553
  %v1693 = vpop.f32.mrb[0].mxu0
  %v1694 = vadd.f32 0.0, %v1693
  %v1695 = vpop.f32.mrb[0].mxu0
  %v1696 = vpop.f32.mrb[0].mxu0
  %v1697 = vadd.f32 0.0, %v1696
  %v1698 = vpop.f32.mrb[0].mxu0
  %1699 = vdwg.mxu0
  %v1700 = vadd.f32 %v1504, %v1686
  %v1701 = vadd.f32 %v1507, %v1689
  %v1702 = vadd.f32 %v1512, %v1694
  %v1703 = vadd.f32 %v1515, %v1697
  %v1704 = vlaneseq
  %v1705 = vshrl.u32 %v1704, 7
  %v1706 = vsub.s32 1, %v1705
  %v1707 = vrot.slane %v31, %v1706
  %v1708 = vadd.f32 %v1700, %v1707
  %v1709 = vadd.f32 %v1701, %v1707
  %v1710 = vadd.f32 %v1702, %v1707
  %v1711 = vadd.f32 %v1703, %v1707
  %1712 = vrot.lane.b32.xlu0 %v1708, 8
  %v1713 = vpop.permute.xlu0 %1712
  %1714 = vrot.lane.b32.xlu0 %v1709, 8
  %v1715 = vpop.permute.xlu0 %1714
  %1716 = vrot.lane.b32.xlu0 %v1710, 8
  %v1717 = vpop.permute.xlu0 %1716
  %1718 = vrot.lane.b32.xlu0 %v1711, 8
  %v1719 = vpop.permute.xlu0 %1718
  %v1720 = vadd.f32 %v1708, %v1713
  %v1721 = vadd.f32 %v1709, %v1715
  %v1722 = vadd.f32 %v1710, %v1717
  %v1723 = vadd.f32 %v1711, %v1719
  %1724 = vrot.lane.b32.xlu0 %v1720, 16
  %v1725 = vpop.permute.xlu0 %1724
  %1726 = vrot.lane.b32.xlu0 %v1721, 16
  %v1727 = vpop.permute.xlu0 %1726
  %1728 = vrot.lane.b32.xlu0 %v1722, 16
  %v1729 = vpop.permute.xlu0 %1728
  %1730 = vrot.lane.b32.xlu0 %v1723, 16
  %v1731 = vpop.permute.xlu0 %1730
  %v1732 = vadd.f32 %v1720, %v1725
  %v1733 = vadd.f32 %v1721, %v1727
  %v1734 = vadd.f32 %v1722, %v1729
  %v1735 = vadd.f32 %v1723, %v1731
  %1736 = vrot.lane.b32.xlu0 %v1732, 32
  %v1737 = vpop.permute.xlu0 %1736
  %1738 = vrot.lane.b32.xlu0 %v1733, 32
  %v1739 = vpop.permute.xlu0 %1738
  %1740 = vrot.lane.b32.xlu0 %v1734, 32
  %v1741 = vpop.permute.xlu0 %1740
  %1742 = vrot.lane.b32.xlu0 %v1735, 32
  %v1743 = vpop.permute.xlu0 %1742
  %v1744 = vadd.f32 %v1732, %v1737
  %v1745 = vadd.f32 %v1733, %v1739
  %v1746 = vadd.f32 %v1734, %v1741
  %v1747 = vadd.f32 %v1735, %v1743
  %1748 = vrot.lane.b32.xlu0 %v1744, 64
  %v1749 = vpop.permute.xlu0 %1748
  %1750 = vrot.lane.b32.xlu0 %v1745, 64
  %v1751 = vpop.permute.xlu0 %1750
  %1752 = vrot.lane.b32.xlu0 %v1746, 64
  %v1753 = vpop.permute.xlu0 %1752
  %1754 = vrot.lane.b32.xlu0 %v1747, 64
  %v1755 = vpop.permute.xlu0 %1754
  %v1756 = vadd.f32 %v1744, %v1749
  %v1757 = vadd.f32 %v1745, %v1751
  %v1758 = vadd.f32 %v1746, %v1753
  %v1759 = vadd.f32 %v1747, %v1755
  %v1760 = vadd.f32 %v1756, %v1757
  %v1761 = vadd.f32 %v1760, %v1758
  %v1762 = vadd.f32 %v1761, %v1759
  %v1763 = vrot.slane %v1762, 4
  %v1764 = vadd.f32 %v1762, %v1763
  %v1765 = vrot.slane %v1764, 2
  %v1766 = vadd.f32 %v1764, %v1765
  %v1767 = vrot.slane %v1766, 1
  %v1768 = vadd.f32 %v1766, %v1767
  %v1769 = vmul.f32 %v1768, 0.001953125
  %v1770 = vsub.f32 %v1708, %v1769
  %v1771 = vsub.f32 %v1709, %v1769
  %v1772 = vsub.f32 %v1710, %v1769
  %v1773 = vsub.f32 %v1711, %v1769
  %v1774 = vmul.f32 %v1770, %v1770
  %v1775 = vmul.f32 %v1771, %v1771
  %v1776 = vmul.f32 %v1772, %v1772
  %v1777 = vmul.f32 %v1773, %v1773
  %1778 = vrot.lane.b32.xlu0 %v1774, 8
  %v1779 = vpop.permute.xlu0 %1778
  %1780 = vrot.lane.b32.xlu0 %v1775, 8
  %v1781 = vpop.permute.xlu0 %1780
  %1782 = vrot.lane.b32.xlu0 %v1776, 8
  %v1783 = vpop.permute.xlu0 %1782
  %1784 = vrot.lane.b32.xlu0 %v1777, 8
  %v1785 = vpop.permute.xlu0 %1784
  %v1786 = vadd.f32 %v1774, %v1779
  %v1787 = vadd.f32 %v1775, %v1781
  %v1788 = vadd.f32 %v1776, %v1783
  %v1789 = vadd.f32 %v1777, %v1785
  %1790 = vrot.lane.b32.xlu0 %v1786, 16
  %v1791 = vpop.permute.xlu0 %1790
  %1792 = vrot.lane.b32.xlu0 %v1787, 16
  %v1793 = vpop.permute.xlu0 %1792
  %1794 = vrot.lane.b32.xlu0 %v1788, 16
  %v1795 = vpop.permute.xlu0 %1794
  %1796 = vrot.lane.b32.xlu0 %v1789, 16
  %v1797 = vpop.permute.xlu0 %1796
  %v1798 = vadd.f32 %v1786, %v1791
  %v1799 = vadd.f32 %v1787, %v1793
  %v1800 = vadd.f32 %v1788, %v1795
  %v1801 = vadd.f32 %v1789, %v1797
  %1802 = vrot.lane.b32.xlu0 %v1798, 32
  %v1803 = vpop.permute.xlu0 %1802
  %1804 = vrot.lane.b32.xlu0 %v1799, 32
  %v1805 = vpop.permute.xlu0 %1804
  %1806 = vrot.lane.b32.xlu0 %v1800, 32
  %v1807 = vpop.permute.xlu0 %1806
  %1808 = vrot.lane.b32.xlu0 %v1801, 32
  %v1809 = vpop.permute.xlu0 %1808
  %v1810 = vadd.f32 %v1798, %v1803
  %v1811 = vadd.f32 %v1799, %v1805
  %v1812 = vadd.f32 %v1800, %v1807
  %v1813 = vadd.f32 %v1801, %v1809
  %1814 = vrot.lane.b32.xlu0 %v1810, 64
  %v1815 = vpop.permute.xlu0 %1814
  %1816 = vrot.lane.b32.xlu0 %v1811, 64
  %v1817 = vpop.permute.xlu0 %1816
  %1818 = vrot.lane.b32.xlu0 %v1812, 64
  %v1819 = vpop.permute.xlu0 %1818
  %1820 = vrot.lane.b32.xlu0 %v1813, 64
  %v1821 = vpop.permute.xlu0 %1820
  %v1822 = vadd.f32 %v1810, %v1815
  %v1823 = vadd.f32 %v1811, %v1817
  %v1824 = vadd.f32 %v1812, %v1819
  %v1825 = vadd.f32 %v1813, %v1821
  %v1826 = vadd.f32 %v1822, %v1823
  %v1827 = vadd.f32 %v1826, %v1824
  %v1828 = vadd.f32 %v1827, %v1825
  %v1829 = vrot.slane %v1828, 4
  %v1830 = vadd.f32 %v1828, %v1829
  %v1831 = vrot.slane %v1830, 2
  %v1832 = vadd.f32 %v1830, %v1831
  %v1833 = vrot.slane %v1832, 1
  %v1834 = vadd.f32 %v1832, %v1833
  %v1835 = vmul.f32 %v1834, 0.001953125
  %v1836 = vadd.f32 %v1835, 1e-05
  %v1837 = vrsqrt.pop %v1836
  %v1838 = vmul.f32 %v31, %v1837
  %v1839 = vlaneseq
  %v1840 = vshrl.u32 %v1839, 7
  %v1841 = vsub.s32 2, %v1840
  %v1842 = vrot.slane %v1838, %v1841
  %v1843 = vmul.f32 %v1770, %v1842
  %v1844 = vmul.f32 %v1771, %v1842
  %v1845 = vmul.f32 %v1772, %v1842
  %v1846 = vmul.f32 %v1773, %v1842
  %v1847 = vlaneseq
  %v1848 = vshrl.u32 %v1847, 7
  %v1849 = vsub.s32 3, %v1848
  %v1850 = vrot.slane %v31, %v1849
  %v1851 = vadd.f32 %v1843, %v1850
  %v1852 = vadd.f32 %v1844, %v1850
  %v1853 = vadd.f32 %v1845, %v1850
  %v1854 = vadd.f32 %v1846, %v1850
  %v1855 = vmax.f32 %v1851, 0.0
  %v1856 = vmax.f32 %v1852, 0.0
  %v1857 = vmax.f32 %v1853, 0.0
  %v1858 = vmax.f32 %v1854, 0.0
  %v1859 = vrot.slane %v1855, 7
  %v1860 = vrot.slane %v1856, 7
  %v1861 = vrot.slane %v1857, 7
  %v1862 = vrot.slane %v1858, 7
  %v1863 = vsel %vm1113, %v1861, %v1862
  %v1864 = vsel %vm1113, %v1860, %v1861
  %v1865 = vsel %vm1113, %v1859, %v1860
  %v1866 = vsel %vm1113, %v1862, %v1859
  %v1867 = vmul.f32 %v1866, %v93
  %v1868 = vmul.f32 %v1865, %v94
  %v1869 = vmul.f32 %v1864, %v95
  %v1870 = vmul.f32 %v1863, %v96
  %v1871 = vrot.slane %v1855, 1
  %v1872 = vrot.slane %v1856, 1
  %v1873 = vrot.slane %v1857, 1
  %v1874 = vrot.slane %v1858, 1
  %v1875 = vsel %vm1138, %v1873, %v1874
  %v1876 = vsel %vm1138, %v1872, %v1873
  %v1877 = vsel %vm1138, %v1871, %v1872
  %v1878 = vsel %vm1138, %v1874, %v1871
  %v1879 = vmul.f32 %v1877, %v105
  %v1880 = vmul.f32 %v1876, %v106
  %v1881 = vmul.f32 %v1875, %v107
  %v1882 = vmul.f32 %v1878, %v108
  %v1883 = vld [vmem:[%s6] sm:$0xf]
  %v1884 = vld [vmem:[%s6 + $0x4] sm:$0xf]
  %v1885 = vld [vmem:[%s6 + $0x8] sm:$0xf]
  %v1886 = vld [vmem:[%s6 + $0xc] sm:$0xf]
  %v1887 = vld [vmem:[%s6 + $0x10] sm:$0xf]
  %v1888 = vld [vmem:[%s6 + $0x14] sm:$0xf]
  %v1889 = vld [vmem:[%s6 + $0x18] sm:$0xf]
  %v1890 = vld [vmem:[%s6 + $0x1c] sm:$0xf]
  %v1891 = vld [vmem:[%s6 + $0x20] sm:$0xf]
  %v1892 = vld [vmem:[%s6 + $0x24] sm:$0xf]
  %v1893 = vld [vmem:[%s6 + $0x28] sm:$0xf]
  %v1894 = vld [vmem:[%s6 + $0x2c] sm:$0xf]
  %v1895 = vld [vmem:[%s6 + $0x30] sm:$0xf]
  %v1896 = vld [vmem:[%s6 + $0x34] sm:$0xf]
  %v1897 = vld [vmem:[%s6 + $0x38] sm:$0xf]
  %v1898 = vld [vmem:[%s6 + $0x3c] sm:$0xf]
  %v1899 = vpack.c.bf16 %v1868, %v1867
  %v1900 = vpack.c.bf16 %v1870, %v1869
  %s1901 = scalar_lea.vmem %s6, 64
  %v1902 = vld [vmem:[%s1901] sm:$0xf]
  %v1903 = vld [vmem:[%s1901 + $0x4] sm:$0xf]
  %v1904 = vld [vmem:[%s1901 + $0x8] sm:$0xf]
  %v1905 = vld [vmem:[%s1901 + $0xc] sm:$0xf]
  %v1906 = vld [vmem:[%s1901 + $0x10] sm:$0xf]
  %v1907 = vld [vmem:[%s1901 + $0x14] sm:$0xf]
  %v1908 = vld [vmem:[%s1901 + $0x18] sm:$0xf]
  %v1909 = vld [vmem:[%s1901 + $0x1c] sm:$0xf]
  %v1910 = vld [vmem:[%s1901 + $0x20] sm:$0xf]
  %v1911 = vld [vmem:[%s1901 + $0x24] sm:$0xf]
  %v1912 = vld [vmem:[%s1901 + $0x28] sm:$0xf]
  %v1913 = vld [vmem:[%s1901 + $0x2c] sm:$0xf]
  %v1914 = vld [vmem:[%s1901 + $0x30] sm:$0xf]
  %v1915 = vld [vmem:[%s1901 + $0x34] sm:$0xf]
  %v1916 = vld [vmem:[%s1901 + $0x38] sm:$0xf]
  %v1917 = vld [vmem:[%s1901 + $0x3c] sm:$0xf]
  %v1918 = vpack.c.bf16 %v1856, %v1855
  %v1919 = vpack.c.bf16 %v1858, %v1857
  %v1936 = vunpack.c.l.b16 %v1902
  %v1937 = vunpack.c.l.b16 %v1903
  %v1938 = vunpack.c.l.b16 %v1904
  %v1939 = vunpack.c.l.b16 %v1905
  %v1940 = vunpack.c.l.b16 %v1906
  %v1941 = vunpack.c.l.b16 %v1907
  %v1942 = vunpack.c.l.b16 %v1908
  %v1943 = vunpack.c.l.b16 %v1909
  %v1944 = vunpack.c.l.b16 %v1910
  %v1945 = vunpack.c.l.b16 %v1911
  %v1946 = vunpack.c.l.b16 %v1912
  %v1947 = vunpack.c.l.b16 %v1913
  %v1948 = vunpack.c.l.b16 %v1914
  %v1949 = vunpack.c.l.b16 %v1915
  %v1950 = vunpack.c.l.b16 %v1916
  %v1951 = vunpack.c.l.b16 %v1917
  %v1952 = vpack.c.b16 %v1937, %v1936
  %v1953 = vpack.c.b16 %v1939, %v1938
  %v1954 = vpack.c.b16 %v1941, %v1940
  %v1955 = vpack.c.b16 %v1943, %v1942
  %v1956 = vpack.c.b16 %v1945, %v1944
  %v1957 = vpack.c.b16 %v1947, %v1946
  %v1958 = vpack.c.b16 %v1949, %v1948
  %v1959 = vpack.c.b16 %v1951, %v1950
  %1968 = vmatprep.subr.bf16.mxu0 0
  %1969 = vmatpush1.bf16.msra.mxu0 %v1952
  %1970 = vmatprep.subr.bf16.mxu0 0
  %1971 = vmatpush1.bf16.msra.mxu0 %v1953
  %1972 = vmatprep.subr.bf16.mxu0 0
  %1973 = vmatpush1.bf16.msra.mxu0 %v1954
  %1974 = vmatprep.subr.bf16.mxu0 0
  %1975 = vmatpush1.bf16.msra.mxu0 %v1955
  %1976 = vmatprep.subr.bf16.mxu0 0
  %1977 = vmatpush1.bf16.msra.mxu0 %v1956
  %1978 = vmatprep.subr.bf16.mxu0 0
  %1979 = vmatpush1.bf16.msra.mxu0 %v1957
  %1980 = vmatprep.subr.bf16.mxu0 0
  %1981 = vmatpush1.bf16.msra.mxu0 %v1958
  %1982 = vmatprep.subr.bf16.mxu0 0
  %1983 = vmatpush1.bf16.msra.mxu0 %v1959
  %1984 = vmatprep.subr.bf16.mxu0 0
  %1985 = vmatpush1.bf16.msra.mxu0 0
  %1986 = vmatprep.subr.bf16.mxu0 0
  %1987 = vmatpush1.bf16.msra.mxu0 0
  %1988 = vmatprep.subr.bf16.mxu0 0
  %1989 = vmatpush1.bf16.msra.mxu0 0
  %1990 = vmatprep.subr.bf16.mxu0 0
  %1991 = vmatpush1.bf16.msra.mxu0 0
  %1992 = vmatprep.subr.bf16.mxu0 0
  %1993 = vmatpush1.bf16.msra.mxu0 0
  %1994 = vmatprep.subr.bf16.mxu0 0
  %1995 = vmatpush1.bf16.msra.mxu0 0
  %1996 = vmatprep.subr.bf16.mxu0 0
  %1997 = vmatpush1.bf16.msra.mxu0 0
  %1998 = vmatprep.subr.bf16.mxu0 0
  %1999 = vmatpush1.bf16.msra.mxu0 0
  %2000 = vmatprep.mubr.bf16.mxu0 0
  %2001 = vmatmul.mubr.bf16.gmra.mrb[0].mxu0 %v1918
  %v2002 = vpop.f32.mrb[0].mxu0
  %v2003 = vadd.f32 0.0, %v2002
  %v2004 = vpop.f32.mrb[0].mxu0
  %v2005 = vpop.f32.mrb[0].mxu0
  %v2006 = vadd.f32 0.0, %v2005
  %v2007 = vpop.f32.mrb[0].mxu0
  %2008 = vmatprep.mubr.bf16.mxu0 0
  %2009 = vmatmul.mubr.bf16.gmra.mrb[0].mxu0 %v1919
  %v2010 = vpop.f32.mrb[0].mxu0
  %v2011 = vadd.f32 0.0, %v2010
  %v2012 = vpop.f32.mrb[0].mxu0
  %v2013 = vpop.f32.mrb[0].mxu0
  %v2014 = vadd.f32 0.0, %v2013
  %v2015 = vpop.f32.mrb[0].mxu0
  %2016 = vdwg.mxu0
  %v2033 = vunpack.c.l.b16 %v1883
  %v2034 = vunpack.c.l.b16 %v1884
  %v2035 = vunpack.c.l.b16 %v1885
  %v2036 = vunpack.c.l.b16 %v1886
  %v2037 = vunpack.c.l.b16 %v1887
  %v2038 = vunpack.c.l.b16 %v1888
  %v2039 = vunpack.c.l.b16 %v1889
  %v2040 = vunpack.c.l.b16 %v1890
  %v2041 = vunpack.c.l.b16 %v1891
  %v2042 = vunpack.c.l.b16 %v1892
  %v2043 = vunpack.c.l.b16 %v1893
  %v2044 = vunpack.c.l.b16 %v1894
  %v2045 = vunpack.c.l.b16 %v1895
  %v2046 = vunpack.c.l.b16 %v1896
  %v2047 = vunpack.c.l.b16 %v1897
  %v2048 = vunpack.c.l.b16 %v1898
  %v2049 = vpack.c.b16 %v2034, %v2033
  %v2050 = vpack.c.b16 %v2036, %v2035
  %v2051 = vpack.c.b16 %v2038, %v2037
  %v2052 = vpack.c.b16 %v2040, %v2039
  %v2053 = vpack.c.b16 %v2042, %v2041
  %v2054 = vpack.c.b16 %v2044, %v2043
  %v2055 = vpack.c.b16 %v2046, %v2045
  %v2056 = vpack.c.b16 %v2048, %v2047
  %2065 = vmatprep.subr.bf16.mxu0 0
  %2066 = vmatpush1.bf16.msra.mxu0 %v2049
  %2067 = vmatprep.subr.bf16.mxu0 0
  %2068 = vmatpush1.bf16.msra.mxu0 %v2050
  %2069 = vmatprep.subr.bf16.mxu0 0
  %2070 = vmatpush1.bf16.msra.mxu0 %v2051
  %2071 = vmatprep.subr.bf16.mxu0 0
  %2072 = vmatpush1.bf16.msra.mxu0 %v2052
  %2073 = vmatprep.subr.bf16.mxu0 0
  %2074 = vmatpush1.bf16.msra.mxu0 %v2053
  %2075 = vmatprep.subr.bf16.mxu0 0
  %2076 = vmatpush1.bf16.msra.mxu0 %v2054
  %2077 = vmatprep.subr.bf16.mxu0 0
  %2078 = vmatpush1.bf16.msra.mxu0 %v2055
  %2079 = vmatprep.subr.bf16.mxu0 0
  %2080 = vmatpush1.bf16.msra.mxu0 %v2056
  %2081 = vmatprep.subr.bf16.mxu0 0
  %2082 = vmatpush1.bf16.msra.mxu0 0
  %2083 = vmatprep.subr.bf16.mxu0 0
  %2084 = vmatpush1.bf16.msra.mxu0 0
  %2085 = vmatprep.subr.bf16.mxu0 0
  %2086 = vmatpush1.bf16.msra.mxu0 0
  %2087 = vmatprep.subr.bf16.mxu0 0
  %2088 = vmatpush1.bf16.msra.mxu0 0
  %2089 = vmatprep.subr.bf16.mxu0 0
  %2090 = vmatpush1.bf16.msra.mxu0 0
  %2091 = vmatprep.subr.bf16.mxu0 0
  %2092 = vmatpush1.bf16.msra.mxu0 0
  %2093 = vmatprep.subr.bf16.mxu0 0
  %2094 = vmatpush1.bf16.msra.mxu0 0
  %2095 = vmatprep.subr.bf16.mxu0 0
  %2096 = vmatpush1.bf16.msra.mxu0 0
  %2097 = vmatprep.mubr.bf16.mxu0 0
  %2098 = vmatmul.mubr.bf16.gmra.mrb[0].mxu0 %v1899
  %v2099 = vpop.f32.mrb[0].mxu0
  %v2100 = vadd.f32 %v2003, %v2099
  %v2101 = vpop.f32.mrb[0].mxu0
  %v2102 = vpop.f32.mrb[0].mxu0
  %v2103 = vadd.f32 %v2006, %v2102
  %v2104 = vpop.f32.mrb[0].mxu0
  %2105 = vmatprep.mubr.bf16.mxu0 0
  %2106 = vmatmul.mubr.bf16.gmra.mrb[0].mxu0 %v1900
  %v2107 = vpop.f32.mrb[0].mxu0
  %v2108 = vadd.f32 %v2011, %v2107
  %v2109 = vpop.f32.mrb[0].mxu0
  %v2110 = vpop.f32.mrb[0].mxu0
  %v2111 = vadd.f32 %v2014, %v2110
  %v2112 = vpop.f32.mrb[0].mxu0
  %2113 = vdwg.mxu0
  %s2114 = scalar_lea.vmem %s6, 128
  %v2115 = vld [vmem:[%s2114] sm:$0xf]
  %v2116 = vld [vmem:[%s2114 + $0x4] sm:$0xf]
  %v2117 = vld [vmem:[%s2114 + $0x8] sm:$0xf]
  %v2118 = vld [vmem:[%s2114 + $0xc] sm:$0xf]
  %v2119 = vld [vmem:[%s2114 + $0x10] sm:$0xf]
  %v2120 = vld [vmem:[%s2114 + $0x14] sm:$0xf]
  %v2121 = vld [vmem:[%s2114 + $0x18] sm:$0xf]
  %v2122 = vld [vmem:[%s2114 + $0x1c] sm:$0xf]
  %v2123 = vld [vmem:[%s2114 + $0x20] sm:$0xf]
  %v2124 = vld [vmem:[%s2114 + $0x24] sm:$0xf]
  %v2125 = vld [vmem:[%s2114 + $0x28] sm:$0xf]
  %v2126 = vld [vmem:[%s2114 + $0x2c] sm:$0xf]
  %v2127 = vld [vmem:[%s2114 + $0x30] sm:$0xf]
  %v2128 = vld [vmem:[%s2114 + $0x34] sm:$0xf]
  %v2129 = vld [vmem:[%s2114 + $0x38] sm:$0xf]
  %v2130 = vld [vmem:[%s2114 + $0x3c] sm:$0xf]
  %v2131 = vpack.c.bf16 %v1880, %v1879
  %v2132 = vpack.c.bf16 %v1882, %v1881
  %v2149 = vunpack.c.l.b16 %v2115
  %v2150 = vunpack.c.l.b16 %v2116
  %v2151 = vunpack.c.l.b16 %v2117
  %v2152 = vunpack.c.l.b16 %v2118
  %v2153 = vunpack.c.l.b16 %v2119
  %v2154 = vunpack.c.l.b16 %v2120
  %v2155 = vunpack.c.l.b16 %v2121
  %v2156 = vunpack.c.l.b16 %v2122
  %v2157 = vunpack.c.l.b16 %v2123
  %v2158 = vunpack.c.l.b16 %v2124
  %v2159 = vunpack.c.l.b16 %v2125
  %v2160 = vunpack.c.l.b16 %v2126
  %v2161 = vunpack.c.l.b16 %v2127
  %v2162 = vunpack.c.l.b16 %v2128
  %v2163 = vunpack.c.l.b16 %v2129
  %v2164 = vunpack.c.l.b16 %v2130
  %v2165 = vpack.c.b16 %v2150, %v2149
  %v2166 = vpack.c.b16 %v2152, %v2151
  %v2167 = vpack.c.b16 %v2154, %v2153
  %v2168 = vpack.c.b16 %v2156, %v2155
  %v2169 = vpack.c.b16 %v2158, %v2157
  %v2170 = vpack.c.b16 %v2160, %v2159
  %v2171 = vpack.c.b16 %v2162, %v2161
  %v2172 = vpack.c.b16 %v2164, %v2163
  %2181 = vmatprep.subr.bf16.mxu0 0
  %2182 = vmatpush1.bf16.msra.mxu0 %v2165
  %2183 = vmatprep.subr.bf16.mxu0 0
  %2184 = vmatpush1.bf16.msra.mxu0 %v2166
  %2185 = vmatprep.subr.bf16.mxu0 0
  %2186 = vmatpush1.bf16.msra.mxu0 %v2167
  %2187 = vmatprep.subr.bf16.mxu0 0
  %2188 = vmatpush1.bf16.msra.mxu0 %v2168
  %2189 = vmatprep.subr.bf16.mxu0 0
  %2190 = vmatpush1.bf16.msra.mxu0 %v2169
  %2191 = vmatprep.subr.bf16.mxu0 0
  %2192 = vmatpush1.bf16.msra.mxu0 %v2170
  %2193 = vmatprep.subr.bf16.mxu0 0
  %2194 = vmatpush1.bf16.msra.mxu0 %v2171
  %2195 = vmatprep.subr.bf16.mxu0 0
  %2196 = vmatpush1.bf16.msra.mxu0 %v2172
  %2197 = vmatprep.subr.bf16.mxu0 0
  %2198 = vmatpush1.bf16.msra.mxu0 0
  %2199 = vmatprep.subr.bf16.mxu0 0
  %2200 = vmatpush1.bf16.msra.mxu0 0
  %2201 = vmatprep.subr.bf16.mxu0 0
  %2202 = vmatpush1.bf16.msra.mxu0 0
  %2203 = vmatprep.subr.bf16.mxu0 0
  %2204 = vmatpush1.bf16.msra.mxu0 0
  %2205 = vmatprep.subr.bf16.mxu0 0
  %2206 = vmatpush1.bf16.msra.mxu0 0
  %2207 = vmatprep.subr.bf16.mxu0 0
  %2208 = vmatpush1.bf16.msra.mxu0 0
  %2209 = vmatprep.subr.bf16.mxu0 0
  %2210 = vmatpush1.bf16.msra.mxu0 0
  %2211 = vmatprep.subr.bf16.mxu0 0
  %2212 = vmatpush1.bf16.msra.mxu0 0
  %2213 = vmatprep.mubr.bf16.mxu0 0
  %2214 = vmatmul.mubr.bf16.gmra.mrb[0].mxu0 %v2131
  %v2215 = vpop.f32.mrb[0].mxu0
  %v2216 = vadd.f32 0.0, %v2215
  %v2217 = vpop.f32.mrb[0].mxu0
  %v2218 = vpop.f32.mrb[0].mxu0
  %v2219 = vadd.f32 0.0, %v2218
  %v2220 = vpop.f32.mrb[0].mxu0
  %2221 = vmatprep.mubr.bf16.mxu0 0
  %2222 = vmatmul.mubr.bf16.gmra.mrb[0].mxu0 %v2132
  %v2223 = vpop.f32.mrb[0].mxu0
  %v2224 = vadd.f32 0.0, %v2223
  %v2225 = vpop.f32.mrb[0].mxu0
  %v2226 = vpop.f32.mrb[0].mxu0
  %v2227 = vadd.f32 0.0, %v2226
  %v2228 = vpop.f32.mrb[0].mxu0
  %2229 = vdwg.mxu0
  %v2230 = vadd.f32 %v2100, %v2216
  %v2231 = vadd.f32 %v2103, %v2219
  %v2232 = vadd.f32 %v2108, %v2224
  %v2233 = vadd.f32 %v2111, %v2227
  %v2234 = vlaneseq
  %v2235 = vshrl.u32 %v2234, 7
  %v2236 = vsub.s32 4, %v2235
  %v2237 = vrot.slane %v31, %v2236
  %v2238 = vadd.f32 %v2230, %v2237
  %v2239 = vadd.f32 %v2231, %v2237
  %v2240 = vadd.f32 %v2232, %v2237
  %v2241 = vadd.f32 %v2233, %v2237
  %2242 = vrot.lane.b32.xlu0 %v2238, 8
  %v2243 = vpop.permute.xlu0 %2242
  %2244 = vrot.lane.b32.xlu0 %v2239, 8
  %v2245 = vpop.permute.xlu0 %2244
  %2246 = vrot.lane.b32.xlu0 %v2240, 8
  %v2247 = vpop.permute.xlu0 %2246
  %2248 = vrot.lane.b32.xlu0 %v2241, 8
  %v2249 = vpop.permute.xlu0 %2248
  %v2250 = vadd.f32 %v2238, %v2243
  %v2251 = vadd.f32 %v2239, %v2245
  %v2252 = vadd.f32 %v2240, %v2247
  %v2253 = vadd.f32 %v2241, %v2249
  %2254 = vrot.lane.b32.xlu0 %v2250, 16
  %v2255 = vpop.permute.xlu0 %2254
  %2256 = vrot.lane.b32.xlu0 %v2251, 16
  %v2257 = vpop.permute.xlu0 %2256
  %2258 = vrot.lane.b32.xlu0 %v2252, 16
  %v2259 = vpop.permute.xlu0 %2258
  %2260 = vrot.lane.b32.xlu0 %v2253, 16
  %v2261 = vpop.permute.xlu0 %2260
  %v2262 = vadd.f32 %v2250, %v2255
  %v2263 = vadd.f32 %v2251, %v2257
  %v2264 = vadd.f32 %v2252, %v2259
  %v2265 = vadd.f32 %v2253, %v2261
  %2266 = vrot.lane.b32.xlu0 %v2262, 32
  %v2267 = vpop.permute.xlu0 %2266
  %2268 = vrot.lane.b32.xlu0 %v2263, 32
  %v2269 = vpop.permute.xlu0 %2268
  %2270 = vrot.lane.b32.xlu0 %v2264, 32
  %v2271 = vpop.permute.xlu0 %2270
  %2272 = vrot.lane.b32.xlu0 %v2265, 32
  %v2273 = vpop.permute.xlu0 %2272
  %v2274 = vadd.f32 %v2262, %v2267
  %v2275 = vadd.f32 %v2263, %v2269
  %v2276 = vadd.f32 %v2264, %v2271
  %v2277 = vadd.f32 %v2265, %v2273
  %2278 = vrot.lane.b32.xlu0 %v2274, 64
  %v2279 = vpop.permute.xlu0 %2278
  %2280 = vrot.lane.b32.xlu0 %v2275, 64
  %v2281 = vpop.permute.xlu0 %2280
  %2282 = vrot.lane.b32.xlu0 %v2276, 64
  %v2283 = vpop.permute.xlu0 %2282
  %2284 = vrot.lane.b32.xlu0 %v2277, 64
  %v2285 = vpop.permute.xlu0 %2284
  %v2286 = vadd.f32 %v2274, %v2279
  %v2287 = vadd.f32 %v2275, %v2281
  %v2288 = vadd.f32 %v2276, %v2283
  %v2289 = vadd.f32 %v2277, %v2285
  %v2290 = vadd.f32 %v2286, %v2287
  %v2291 = vadd.f32 %v2290, %v2288
  %v2292 = vadd.f32 %v2291, %v2289
  %v2293 = vrot.slane %v2292, 4
  %v2294 = vadd.f32 %v2292, %v2293
  %v2295 = vrot.slane %v2294, 2
  %v2296 = vadd.f32 %v2294, %v2295
  %v2297 = vrot.slane %v2296, 1
  %v2298 = vadd.f32 %v2296, %v2297
  %v2299 = vmul.f32 %v2298, 0.001953125
  %v2300 = vsub.f32 %v2238, %v2299
  %v2301 = vsub.f32 %v2239, %v2299
  %v2302 = vsub.f32 %v2240, %v2299
  %v2303 = vsub.f32 %v2241, %v2299
  %v2304 = vmul.f32 %v2300, %v2300
  %v2305 = vmul.f32 %v2301, %v2301
  %v2306 = vmul.f32 %v2302, %v2302
  %v2307 = vmul.f32 %v2303, %v2303
  %2308 = vrot.lane.b32.xlu0 %v2304, 8
  %v2309 = vpop.permute.xlu0 %2308
  %2310 = vrot.lane.b32.xlu0 %v2305, 8
  %v2311 = vpop.permute.xlu0 %2310
  %2312 = vrot.lane.b32.xlu0 %v2306, 8
  %v2313 = vpop.permute.xlu0 %2312
  %2314 = vrot.lane.b32.xlu0 %v2307, 8
  %v2315 = vpop.permute.xlu0 %2314
  %v2316 = vadd.f32 %v2304, %v2309
  %v2317 = vadd.f32 %v2305, %v2311
  %v2318 = vadd.f32 %v2306, %v2313
  %v2319 = vadd.f32 %v2307, %v2315
  %2320 = vrot.lane.b32.xlu0 %v2316, 16
  %v2321 = vpop.permute.xlu0 %2320
  %2322 = vrot.lane.b32.xlu0 %v2317, 16
  %v2323 = vpop.permute.xlu0 %2322
  %2324 = vrot.lane.b32.xlu0 %v2318, 16
  %v2325 = vpop.permute.xlu0 %2324
  %2326 = vrot.lane.b32.xlu0 %v2319, 16
  %v2327 = vpop.permute.xlu0 %2326
  %v2328 = vadd.f32 %v2316, %v2321
  %v2329 = vadd.f32 %v2317, %v2323
  %v2330 = vadd.f32 %v2318, %v2325
  %v2331 = vadd.f32 %v2319, %v2327
  %2332 = vrot.lane.b32.xlu0 %v2328, 32
  %v2333 = vpop.permute.xlu0 %2332
  %2334 = vrot.lane.b32.xlu0 %v2329, 32
  %v2335 = vpop.permute.xlu0 %2334
  %2336 = vrot.lane.b32.xlu0 %v2330, 32
  %v2337 = vpop.permute.xlu0 %2336
  %2338 = vrot.lane.b32.xlu0 %v2331, 32
  %v2339 = vpop.permute.xlu0 %2338
  %v2340 = vadd.f32 %v2328, %v2333
  %v2341 = vadd.f32 %v2329, %v2335
  %v2342 = vadd.f32 %v2330, %v2337
  %v2343 = vadd.f32 %v2331, %v2339
  %2344 = vrot.lane.b32.xlu0 %v2340, 64
  %v2345 = vpop.permute.xlu0 %2344
  %2346 = vrot.lane.b32.xlu0 %v2341, 64
  %v2347 = vpop.permute.xlu0 %2346
  %2348 = vrot.lane.b32.xlu0 %v2342, 64
  %v2349 = vpop.permute.xlu0 %2348
  %2350 = vrot.lane.b32.xlu0 %v2343, 64
  %v2351 = vpop.permute.xlu0 %2350
  %v2352 = vadd.f32 %v2340, %v2345
  %v2353 = vadd.f32 %v2341, %v2347
  %v2354 = vadd.f32 %v2342, %v2349
  %v2355 = vadd.f32 %v2343, %v2351
  %v2356 = vadd.f32 %v2352, %v2353
  %v2357 = vadd.f32 %v2356, %v2354
  %v2358 = vadd.f32 %v2357, %v2355
  %v2359 = vrot.slane %v2358, 4
  %v2360 = vadd.f32 %v2358, %v2359
  %v2361 = vrot.slane %v2360, 2
  %v2362 = vadd.f32 %v2360, %v2361
  %v2363 = vrot.slane %v2362, 1
  %v2364 = vadd.f32 %v2362, %v2363
  %v2365 = vmul.f32 %v2364, 0.001953125
  %v2366 = vadd.f32 %v2365, 1e-05
  %v2367 = vrsqrt.pop %v2366
  %v2368 = vmul.f32 %v31, %v2367
  %v2369 = vlaneseq
  %v2370 = vshrl.u32 %v2369, 7
  %v2371 = vsub.s32 5, %v2370
  %v2372 = vrot.slane %v2368, %v2371
  %v2373 = vmul.f32 %v2300, %v2372
  %v2374 = vmul.f32 %v2301, %v2372
  %v2375 = vmul.f32 %v2302, %v2372
  %v2376 = vmul.f32 %v2303, %v2372
  %v2377 = vlaneseq
  %v2378 = vshrl.u32 %v2377, 7
  %v2379 = vsub.s32 6, %v2378
  %v2380 = vrot.slane %v31, %v2379
  %v2381 = vadd.f32 %v2373, %v2380
  %v2382 = vadd.f32 %v2374, %v2380
  %v2383 = vadd.f32 %v2375, %v2380
  %v2384 = vadd.f32 %v2376, %v2380
  %v2385 = vmax.f32 %v2381, 0.0
  %v2386 = vmax.f32 %v2382, 0.0
  %v2387 = vmax.f32 %v2383, 0.0
  %v2388 = vmax.f32 %v2384, 0.0
  %2389 = vst [vmem:[%s8] sm:$0xff] %v2385
  %2390 = vst [vmem:[%s8 + $0x8] sm:$0xff] %v2386
  %2391 = vst [vmem:[%s8 + $0x10] sm:$0xff] %v2387
  %2392 = vst [vmem:[%s8 + $0x18] sm:$0xff] %v2388
  // Predicated region
  $region34: #{up_block_forward.1} parent=0 // pred_check
    _
  $region35: #{up_block_forward.1} parent=0 // pred_check_branch
    %2394 = sbr.rel (0) target = $region37
  $region36: #{up_block_forward.1} parent=0 // pred_region
    _
  $region37: #{up_block_forward.1} parent=0 // pred_fallthru
    _
  // Predicated region
  $region38: #{up_block_forward.1} parent=0 // pred_check
    _
  $region39: #{up_block_forward.1} parent=0 // pred_check_branch
    %2396 = sbr.rel (0) target = $region41
  $region40: #{up_block_forward.1} parent=0 // pred_region
    _
  $region41: #{up_block_forward.1} parent=0 // pred_fallthru
    _

</llo_original>
